<compile_context>
chip_gen: v7x
topology: tpu7x:2x2x1
jax: 0.10.0
libtpu: 0.0.40
codegen_flags: <defaults>
</compile_context>

<pallas_src>
import functools

import jax
import jax.numpy as jnp
from jax.experimental import pallas as pl
from jax.experimental.pallas import tpu as pltpu

_EPS = 1e-5


def _convblock_kernel(x_ref,
                      wb1_ref, b1_ref, g1_ref, be1_ref,
                      wb2_ref, b2_ref, g2_ref, be2_ref,
                      wb3_ref, b3_ref, g3_ref, be3_ref,
                      out_ref, *, H, W, cout, last_block, compute_dtype):
    """Fused (conv3x3 -> ReLU -> BatchNorm) x3 on a lane-dense [N*H, W*C] slab."""
    NH = x_ref.shape[0]
    L = W * cout                                       # output lane width

    # Row-validity masks for the kh=0 / kh=2 taps (image/batch boundaries),
    # computed in-kernel and broadcast to the full output width ONCE (JAX does
    # not CSE broadcast_in_dim, so hoisting avoids re-emitting it per layer).
    h_mod = jax.lax.broadcasted_iota(jnp.int32, (NH, 1), 0) % H
    mask_up = jnp.broadcast_to((h_mod >= 1).astype(jnp.float32), (NH, L))
    mask_dn = jnp.broadcast_to((h_mod <= H - 2).astype(jnp.float32), (NH, L))

    def conv3x3(src_c, wb_ref, b_ref):
        # src_c: [NH, W*Cin] in compute_dtype.
        # wb_ref: [W*Cin, 3*W*Cout] banded weights, the three kh bands fused
        # along the MXU N dimension -> a single matmul per layer (N = 3*L).
        z = jnp.dot(src_c, wb_ref[...], preferred_element_type=jnp.float32)
        z0 = z[:, 0 * L:1 * L]      # kh=0 band evaluated at input row h
        z1 = z[:, 1 * L:2 * L]      # kh=1 band (same row)
        z2 = z[:, 2 * L:3 * L]      # kh=2 band evaluated at input row h
        # Row shift commutes with the lane-contracting matmul, so the kh
        # shifts are applied to the f32 output bands via XLU sublane rolls:
        #   out[h] += z0[h-1]  (valid for h >= 1)
        #   out[h] += z2[h+1]  (valid for h <= H-2)
        y = (z1
             + pltpu.roll(z0, shift=1, axis=0) * mask_up
             + pltpu.roll(z2, shift=NH - 1, axis=0) * mask_dn)
        return y + b_ref[...]

    def relu_bn(y, g_ref, be_ref):
        y = jnp.maximum(y, 0.0)                               # ReLU (f32)
        # Fused sum / sum-of-squares (var = E[y^2] - mean^2), all in f32.
        s1 = jnp.sum(y, axis=0, keepdims=True)                # [1, L]
        s2 = jnp.sum(y * y, axis=0, keepdims=True)            # [1, L]
        # Exact per-channel reduction across the W lane groups: cyclic
        # roll-add tree on the XLU (L == W*cout, W a power of two).
        shift = cout
        while shift < L:
            s1 = s1 + pltpu.roll(s1, shift=shift, axis=1)
            s2 = s2 + pltpu.roll(s2, shift=shift, axis=1)
            shift *= 2
        inv_cnt = 1.0 / float(NH * W)                         # N*H*W per channel
        mean = s1 * inv_cnt
        var = s2 * inv_cnt - mean * mean                      # biased variance
        inv_std = jax.lax.rsqrt(var + _EPS)
        scale = g_ref[...] * inv_std                          # gamma/sqrt(var+eps)
        offset = be_ref[...] - mean * scale
        return y * scale + offset

    # Layer inputs are cast to compute_dtype ONCE per layer (x_ref already is).
    y = relu_bn(conv3x3(x_ref[...], wb1_ref, b1_ref), g1_ref, be1_ref)
    y = relu_bn(conv3x3(y.astype(compute_dtype), wb2_ref, b2_ref), g2_ref, be2_ref)
    y = conv3x3(y.astype(compute_dtype), wb3_ref, b3_ref)
    if not last_block:
        y = relu_bn(y, g3_ref, be3_ref)
    out_ref[...] = y.astype(out_ref.dtype)


def _band_weights(w_oihw, W, dtype):
    """Fold kw taps + W zero-padding of a 3x3 conv into N-fused banded matrices.

    Returns wb of shape [W*Cin, 3*W*Cout] with, for kh-block kh:
      wb[(w+kw-1)*Cin + ci, kh*W*Cout + w*Cout + co] = w[co, ci, kh, kw]
    (entries for out-of-range w+kw-1 are zero, i.e. the W padding).
    """
    cout, cin, KH, KW = w_oihw.shape
    wt = jnp.transpose(w_oihw, (2, 3, 1, 0))          # [KH, KW, Cin, Cout]
    cols = jnp.arange(W)
    bands = []
    for kh in range(KH):
        acc = jnp.zeros((W * cin, W * cout), jnp.float32)
        for kw in range(KW):
            sel = (cols[:, None] == cols[None, :] + (kw - 1)).astype(jnp.float32)
            acc = acc + jnp.kron(sel, wt[kh, kw])
        bands.append(acc)
    return jnp.concatenate(bands, axis=1).astype(dtype)   # [W*Cin, 3*W*Cout]


@functools.partial(jax.jit,
                   static_argnames=("last_block", "compute_dtype", "out_dtype"))
def _convblock_forward(x_nchw, conv_w, conv_b, bn_gamma, bn_beta, *,
                       last_block, compute_dtype, out_dtype):
    N, Cin, H, W = x_nchw.shape
    cout = conv_w[0].shape[0]
    assert W & (W - 1) == 0, "W must be a power of two for the lane roll-tree"
    NH, L = N * H, W * cout

    # NCHW -> lane-dense [N*H, W*Cin] slab (wrapper glue, fused by XLA).
    x2d = jnp.transpose(x_nchw, (0, 2, 3, 1)).reshape(NH, W * Cin)
    x2d = x2d.astype(compute_dtype)

    args = [x2d]
    for l in range(3):
        args.append(_band_weights(conv_w[l], W, compute_dtype))
        args.append(jnp.tile(conv_b[l], W).reshape(1, L).astype(jnp.float32))
        args.append(jnp.tile(bn_gamma[l], W).reshape(1, L).astype(jnp.float32))
        args.append(jnp.tile(bn_beta[l], W).reshape(1, L).astype(jnp.float32))

    kernel = functools.partial(_convblock_kernel, H=H, W=W, cout=cout,
                               last_block=last_block,
                               compute_dtype=compute_dtype)

    cins = (Cin, cout, cout)
    flops = sum(2 * NH * (W * c) * (3 * L) for c in cins)   # 1 band matmul/layer
    n_bn = 2 if last_block else 3
    flops += n_bn * 10 * NH * L + 3 * 6 * NH * L            # BN + shift/mask math
    bytes_accessed = int(sum(a.size * a.dtype.itemsize for a in args)
                         + NH * L * jnp.dtype(out_dtype).itemsize)

    out2d = pl.pallas_call(
        kernel,
        out_shape=jax.ShapeDtypeStruct((NH, L), out_dtype),
        in_specs=[pl.BlockSpec(memory_space=pltpu.MemorySpace.VMEM)] * len(args),
        out_specs=pl.BlockSpec(memory_space=pltpu.MemorySpace.VMEM),
        compiler_params=pltpu.CompilerParams(
            vmem_limit_bytes=32 * 1024 * 1024),
        cost_estimate=pl.CostEstimate(flops=int(flops),
                                      transcendentals=int(n_bn * L),
                                      bytes_accessed=bytes_accessed),
    )(*args)

    return jnp.transpose(out2d.reshape(N, H, W, cout), (0, 3, 1, 2))  # -> NCHW


class ConvBlock:
    """JAX/Pallas port of talkNet.ConvBlock (training-mode BatchNorm)."""

    def __init__(self, in_channels, out_channels, kernel_size,
                 last_block=False, stride=(1, 1), padding=(1, 1), key=None):
        assert tuple(kernel_size) == (3, 3) and tuple(stride) == (1, 1) \
            and tuple(padding) == (1, 1), "kernel assumes 3x3 / stride 1 / pad 1"
        self.last_block = last_block
        self.out_channels = out_channels
        kh, kw = kernel_size
        key = jax.random.PRNGKey(0) if key is None else key
        ks = jax.random.split(key, 6)
        c_in = [in_channels, out_channels, out_channels]
        self.conv_w, self.conv_b = [], []
        for i in range(3):
            fan_in = c_in[i] * kh * kw
            bound = 1.0 / (fan_in ** 0.5)
            self.conv_w.append(jax.random.uniform(
                ks[2 * i], (out_channels, c_in[i], kh, kw),
                jnp.float32, -bound, bound))
            self.conv_b.append(jax.random.uniform(
                ks[2 * i + 1], (out_channels,), jnp.float32, -bound, bound))
        # BatchNorm2d affine params at PyTorch defaults.
        self.bn_gamma = [jnp.ones((out_channels,), jnp.float32)] * 3
        self.bn_beta = [jnp.zeros((out_channels,), jnp.float32)] * 3

    def __call__(self, x_nchw, compute_dtype=jnp.bfloat16, out_dtype=jnp.float32):
        return _convblock_forward(x_nchw,
                                  tuple(self.conv_w), tuple(self.conv_b),
                                  tuple(self.bn_gamma), tuple(self.bn_beta),
                                  last_block=self.last_block,
                                  compute_dtype=compute_dtype,
                                  out_dtype=out_dtype)


# ---------------- pure-JAX reference (for correctness check) ----------------
def _ref_forward(block, x_nchw):
    def conv(x, w, b):
        y = jax.lax.conv_general_dilated(
            x, w, window_strides=(1, 1), padding=((1, 1), (1, 1)),
            dimension_numbers=("NCHW", "OIHW", "NCHW"))
        return y + b[None, :, None, None]

    def relu_bn(y, g, be):
        y = jnp.maximum(y, 0.0)
        mean = jnp.mean(y, axis=(0, 2, 3), keepdims=True)
        var = jnp.mean((y - mean) ** 2, axis=(0, 2, 3), keepdims=True)
        return (y - mean) / jnp.sqrt(var + _EPS) * g[None, :, None, None] \
               + be[None, :, None, None]

    x = relu_bn(conv(x_nchw, block.conv_w[0], block.conv_b[0]),
                block.bn_gamma[0], block.bn_beta[0])
    x = relu_bn(conv(x, block.conv_w[1], block.conv_b[1]),
                block.bn_gamma[1], block.bn_beta[1])
    x = conv(x, block.conv_w[2], block.conv_b[2])
    if not block.last_block:
        x = relu_bn(x, block.bn_gamma[2], block.bn_beta[2])
    return x


if __name__ == "__main__":
    key = jax.random.PRNGKey(0)
    k_x, k_p = jax.random.split(key)
    # Small shapes consistent with the module: NCHW input, 3x3 conv, pad 1.
    x = jax.random.normal(k_x, (2, 4, 16, 16), jnp.float32)

    block = ConvBlock(in_channels=4, out_channels=8, kernel_size=(3, 3),
                      last_block=False, key=k_p)

    out_bf16 = jax.block_until_ready(block(x))                  # bf16 MXU operands
    out_f32 = jax.block_until_ready(block(x, compute_dtype=jnp.float32))
    ref = jax.block_until_ready(_ref_forward(block, x))

    assert out_bf16.shape == (2, 8, 16, 16), out_bf16.shape
    # Exact-algorithm check (f32 operands) ...
    assert jnp.allclose(out_f32, ref, atol=1e-4, rtol=1e-4), \
        float(jnp.max(jnp.abs(out_f32 - ref)))
    # ... and production-path check (bf16 operands quantize conv inputs and
    # weights; BN stats and all elementwise math stay in f32).
    assert jnp.allclose(out_bf16, ref, atol=5e-2, rtol=5e-2), \
        float(jnp.max(jnp.abs(out_bf16 - ref)))
    print("KERNEL_OK")
</pallas_src>

<mosaic_0001>
module attributes {stable_mosaic.version = 11 : i64} {
  func.func @_convblock_kernel(%arg0: memref<32x64xbf16, #tpu.memory_space<vmem>>, %arg1: memref<64x384xbf16, #tpu.memory_space<vmem>>, %arg2: memref<1x128xf32, #tpu.memory_space<vmem>>, %arg3: memref<1x128xf32, #tpu.memory_space<vmem>>, %arg4: memref<1x128xf32, #tpu.memory_space<vmem>>, %arg5: memref<128x384xbf16, #tpu.memory_space<vmem>>, %arg6: memref<1x128xf32, #tpu.memory_space<vmem>>, %arg7: memref<1x128xf32, #tpu.memory_space<vmem>>, %arg8: memref<1x128xf32, #tpu.memory_space<vmem>>, %arg9: memref<128x384xbf16, #tpu.memory_space<vmem>>, %arg10: memref<1x128xf32, #tpu.memory_space<vmem>>, %arg11: memref<1x128xf32, #tpu.memory_space<vmem>>, %arg12: memref<1x128xf32, #tpu.memory_space<vmem>>, %arg13: memref<32x128xf32, #tpu.memory_space<vmem>>) attributes {dimension_semantics = [], scalar_prefetch = 0 : i64, scratch_operands = 0 : i64, tpu.core_type = #tpu.core_type<tc>} {
    %0 = tpu.iota {dimensions = array<i32: 0>} : vector<32x1xi32>
    %c16_i32 = arith.constant 16 : i32
    %c0_i32 = arith.constant 0 : i32
    %1 = arith.cmpi eq, %c16_i32, %c0_i32 : i32
    %c1_i32 = arith.constant 1 : i32
    %2 = arith.select %1, %c1_i32, %c16_i32 : i32
    %3 = vector.broadcast %2 : i32 to vector<32x1xi32>
    %4 = arith.remsi %0, %3 : vector<32x1xi32>
    %c0_i32_0 = arith.constant 0 : i32
    %5 = vector.broadcast %c0_i32_0 : i32 to vector<32x1xi32>
    %6 = arith.cmpi ne, %4, %5 : vector<32x1xi32>
    %c0_i32_1 = arith.constant 0 : i32
    %7 = vector.broadcast %c0_i32_1 : i32 to vector<32x1xi32>
    %8 = arith.cmpi slt, %4, %7 : vector<32x1xi32>
    %c0_i32_2 = arith.constant 0 : i32
    %9 = arith.cmpi slt, %2, %c0_i32_2 : i32
    %10 = vector.broadcast %9 : i1 to vector<32x1xi1>
    %11 = vector.broadcast %10 : vector<32x1xi1> to vector<32x1xi1>
    %12 = arith.xori %8, %11 : vector<32x1xi1>
    %13 = arith.andi %12, %6 : vector<32x1xi1>
    %14 = vector.broadcast %2 : i32 to vector<32x1xi32>
    %15 = arith.addi %4, %14 : vector<32x1xi32>
    %16 = arith.select %13, %15, %4 : vector<32x1xi1>, vector<32x1xi32>
    %c1_i32_3 = arith.constant 1 : i32
    %17 = vector.broadcast %c1_i32_3 : i32 to vector<32x1xi32>
    %18 = arith.cmpi sge, %16, %17 : vector<32x1xi32>
    %19 = arith.extui %18 : vector<32x1xi1> to vector<32x1xi32>
    %20 = arith.sitofp %19 : vector<32x1xi32> to vector<32x1xf32>
    %21 = vector.shape_cast %20 : vector<32x1xf32> to vector<32x1xf32>
    %22 = vector.broadcast %21 : vector<32x1xf32> to vector<32x128xf32>
    %c14_i32 = arith.constant 14 : i32
    %23 = vector.broadcast %c14_i32 : i32 to vector<32x1xi32>
    %24 = arith.cmpi sle, %16, %23 : vector<32x1xi32>
    %25 = arith.extui %24 : vector<32x1xi1> to vector<32x1xi32>
    %26 = arith.sitofp %25 : vector<32x1xi32> to vector<32x1xf32>
    %27 = vector.shape_cast %26 : vector<32x1xf32> to vector<32x1xf32>
    %28 = vector.broadcast %27 : vector<32x1xf32> to vector<32x128xf32>
    %c0 = arith.constant 0 : index
    %c0_4 = arith.constant 0 : index
    %29 = vector.load %arg0[%c0, %c0_4] : memref<32x64xbf16, #tpu.memory_space<vmem>>, vector<32x64xbf16>
    %c0_5 = arith.constant 0 : index
    %c0_6 = arith.constant 0 : index
    %30 = vector.load %arg1[%c0_5, %c0_6] : memref<64x384xbf16, #tpu.memory_space<vmem>>, vector<64x384xbf16>
    %cst = arith.constant dense<0.000000e+00> : vector<32x384xf32>
    %31 = tpu.matmul %29, %30, %cst {dimension_numbers = #tpu.dot_dimension_numbers<[1], [0], [0], [1], [0, 0, 1, 1], [], []>} : vector<32x64xbf16>, vector<64x384xbf16>, vector<32x384xf32> -> vector<32x384xf32>
    %32 = vector.extract_strided_slice %31 {offsets = [0, 0], sizes = [32, 128], strides = [1, 1]} : vector<32x384xf32> to vector<32x128xf32>
    %33 = vector.extract_strided_slice %31 {offsets = [0, 128], sizes = [32, 128], strides = [1, 1]} : vector<32x384xf32> to vector<32x128xf32>
    %34 = vector.extract_strided_slice %31 {offsets = [0, 256], sizes = [32, 128], strides = [1, 1]} : vector<32x384xf32> to vector<32x128xf32>
    %c1_i32_7 = arith.constant 1 : i32
    %35 = tpu.dynamic_rotate %32 by %c1_i32_7 dim 0 : vector<32x128xf32>, i32 -> vector<32x128xf32>
    %36 = arith.mulf %35, %22 : vector<32x128xf32>
    %37 = arith.addf %33, %36 : vector<32x128xf32>
    %c31_i32 = arith.constant 31 : i32
    %38 = tpu.dynamic_rotate %34 by %c31_i32 dim 0 : vector<32x128xf32>, i32 -> vector<32x128xf32>
    %39 = arith.mulf %38, %28 : vector<32x128xf32>
    %40 = arith.addf %37, %39 : vector<32x128xf32>
    %c0_8 = arith.constant 0 : index
    %c0_9 = arith.constant 0 : index
    %41 = vector.load %arg2[%c0_8, %c0_9] : memref<1x128xf32, #tpu.memory_space<vmem>>, vector<1x128xf32>
    %42 = vector.broadcast %41 : vector<1x128xf32> to vector<32x128xf32>
    %43 = arith.addf %40, %42 : vector<32x128xf32>
    %cst_10 = arith.constant 0.000000e+00 : f32
    %44 = vector.broadcast %cst_10 : f32 to vector<32x128xf32>
    %45 = arith.maximumf %43, %44 : vector<32x128xf32>
    %cst_11 = arith.constant dense<0.000000e+00> : vector<128xf32>
    %46 = vector.multi_reduction <add>, %45, %cst_11 [0] : vector<32x128xf32> to vector<128xf32>
    %47 = vector.shape_cast %46 : vector<128xf32> to vector<1x128xf32>
    %48 = arith.mulf %45, %45 : vector<32x128xf32>
    %cst_12 = arith.constant dense<0.000000e+00> : vector<128xf32>
    %49 = vector.multi_reduction <add>, %48, %cst_12 [0] : vector<32x128xf32> to vector<128xf32>
    %50 = vector.shape_cast %49 : vector<128xf32> to vector<1x128xf32>
    %c8_i32 = arith.constant 8 : i32
    %51 = tpu.dynamic_rotate %47 by %c8_i32 dim 1 : vector<1x128xf32>, i32 -> vector<1x128xf32>
    %52 = arith.addf %47, %51 : vector<1x128xf32>
    %c8_i32_13 = arith.constant 8 : i32
    %53 = tpu.dynamic_rotate %50 by %c8_i32_13 dim 1 : vector<1x128xf32>, i32 -> vector<1x128xf32>
    %54 = arith.addf %50, %53 : vector<1x128xf32>
    %c16_i32_14 = arith.constant 16 : i32
    %55 = tpu.dynamic_rotate %52 by %c16_i32_14 dim 1 : vector<1x128xf32>, i32 -> vector<1x128xf32>
    %56 = arith.addf %52, %55 : vector<1x128xf32>
    %c16_i32_15 = arith.constant 16 : i32
    %57 = tpu.dynamic_rotate %54 by %c16_i32_15 dim 1 : vector<1x128xf32>, i32 -> vector<1x128xf32>
    %58 = arith.addf %54, %57 : vector<1x128xf32>
    %c32_i32 = arith.constant 32 : i32
    %59 = tpu.dynamic_rotate %56 by %c32_i32 dim 1 : vector<1x128xf32>, i32 -> vector<1x128xf32>
    %60 = arith.addf %56, %59 : vector<1x128xf32>
    %c32_i32_16 = arith.constant 32 : i32
    %61 = tpu.dynamic_rotate %58 by %c32_i32_16 dim 1 : vector<1x128xf32>, i32 -> vector<1x128xf32>
    %62 = arith.addf %58, %61 : vector<1x128xf32>
    %c64_i32 = arith.constant 64 : i32
    %63 = tpu.dynamic_rotate %60 by %c64_i32 dim 1 : vector<1x128xf32>, i32 -> vector<1x128xf32>
    %64 = arith.addf %60, %63 : vector<1x128xf32>
    %c64_i32_17 = arith.constant 64 : i32
    %65 = tpu.dynamic_rotate %62 by %c64_i32_17 dim 1 : vector<1x128xf32>, i32 -> vector<1x128xf32>
    %66 = arith.addf %62, %65 : vector<1x128xf32>
    %cst_18 = arith.constant 0.001953125 : f32
    %67 = vector.broadcast %cst_18 : f32 to vector<1x128xf32>
    %68 = arith.mulf %64, %67 : vector<1x128xf32>
    %cst_19 = arith.constant 0.001953125 : f32
    %69 = vector.broadcast %cst_19 : f32 to vector<1x128xf32>
    %70 = arith.mulf %66, %69 : vector<1x128xf32>
    %71 = arith.mulf %68, %68 : vector<1x128xf32>
    %72 = arith.subf %70, %71 : vector<1x128xf32>
    %cst_20 = arith.constant 9.99999974E-6 : f32
    %73 = vector.broadcast %cst_20 : f32 to vector<1x128xf32>
    %74 = arith.addf %72, %73 : vector<1x128xf32>
    %75 = math.rsqrt %74 : vector<1x128xf32>
    %c0_21 = arith.constant 0 : index
    %c0_22 = arith.constant 0 : index
    %76 = vector.load %arg3[%c0_21, %c0_22] : memref<1x128xf32, #tpu.memory_space<vmem>>, vector<1x128xf32>
    %77 = arith.mulf %76, %75 : vector<1x128xf32>
    %c0_23 = arith.constant 0 : index
    %c0_24 = arith.constant 0 : index
    %78 = vector.load %arg4[%c0_23, %c0_24] : memref<1x128xf32, #tpu.memory_space<vmem>>, vector<1x128xf32>
    %79 = arith.mulf %68, %77 : vector<1x128xf32>
    %80 = arith.subf %78, %79 : vector<1x128xf32>
    %81 = vector.broadcast %77 : vector<1x128xf32> to vector<32x128xf32>
    %82 = arith.mulf %45, %81 : vector<32x128xf32>
    %83 = vector.broadcast %80 : vector<1x128xf32> to vector<32x128xf32>
    %84 = arith.addf %82, %83 : vector<32x128xf32>
    %85 = arith.truncf %84 : vector<32x128xf32> to vector<32x128xbf16>
    %c0_25 = arith.constant 0 : index
    %c0_26 = arith.constant 0 : index
    %86 = vector.load %arg5[%c0_25, %c0_26] : memref<128x384xbf16, #tpu.memory_space<vmem>>, vector<128x384xbf16>
    %cst_27 = arith.constant dense<0.000000e+00> : vector<32x384xf32>
    %87 = tpu.matmul %85, %86, %cst_27 {dimension_numbers = #tpu.dot_dimension_numbers<[1], [0], [0], [1], [0, 0, 1, 1], [], []>} : vector<32x128xbf16>, vector<128x384xbf16>, vector<32x384xf32> -> vector<32x384xf32>
    %88 = vector.extract_strided_slice %87 {offsets = [0, 0], sizes = [32, 128], strides = [1, 1]} : vector<32x384xf32> to vector<32x128xf32>
    %89 = vector.extract_strided_slice %87 {offsets = [0, 128], sizes = [32, 128], strides = [1, 1]} : vector<32x384xf32> to vector<32x128xf32>
    %90 = vector.extract_strided_slice %87 {offsets = [0, 256], sizes = [32, 128], strides = [1, 1]} : vector<32x384xf32> to vector<32x128xf32>
    %c1_i32_28 = arith.constant 1 : i32
    %91 = tpu.dynamic_rotate %88 by %c1_i32_28 dim 0 : vector<32x128xf32>, i32 -> vector<32x128xf32>
    %92 = arith.mulf %91, %22 : vector<32x128xf32>
    %93 = arith.addf %89, %92 : vector<32x128xf32>
    %c31_i32_29 = arith.constant 31 : i32
    %94 = tpu.dynamic_rotate %90 by %c31_i32_29 dim 0 : vector<32x128xf32>, i32 -> vector<32x128xf32>
    %95 = arith.mulf %94, %28 : vector<32x128xf32>
    %96 = arith.addf %93, %95 : vector<32x128xf32>
    %c0_30 = arith.constant 0 : index
    %c0_31 = arith.constant 0 : index
    %97 = vector.load %arg6[%c0_30, %c0_31] : memref<1x128xf32, #tpu.memory_space<vmem>>, vector<1x128xf32>
    %98 = vector.broadcast %97 : vector<1x128xf32> to vector<32x128xf32>
    %99 = arith.addf %96, %98 : vector<32x128xf32>
    %cst_32 = arith.constant 0.000000e+00 : f32
    %100 = vector.broadcast %cst_32 : f32 to vector<32x128xf32>
    %101 = arith.maximumf %99, %100 : vector<32x128xf32>
    %cst_33 = arith.constant dense<0.000000e+00> : vector<128xf32>
    %102 = vector.multi_reduction <add>, %101, %cst_33 [0] : vector<32x128xf32> to vector<128xf32>
    %103 = vector.shape_cast %102 : vector<128xf32> to vector<1x128xf32>
    %104 = arith.mulf %101, %101 : vector<32x128xf32>
    %cst_34 = arith.constant dense<0.000000e+00> : vector<128xf32>
    %105 = vector.multi_reduction <add>, %104, %cst_34 [0] : vector<32x128xf32> to vector<128xf32>
    %106 = vector.shape_cast %105 : vector<128xf32> to vector<1x128xf32>
    %c8_i32_35 = arith.constant 8 : i32
    %107 = tpu.dynamic_rotate %103 by %c8_i32_35 dim 1 : vector<1x128xf32>, i32 -> vector<1x128xf32>
    %108 = arith.addf %103, %107 : vector<1x128xf32>
    %c8_i32_36 = arith.constant 8 : i32
    %109 = tpu.dynamic_rotate %106 by %c8_i32_36 dim 1 : vector<1x128xf32>, i32 -> vector<1x128xf32>
    %110 = arith.addf %106, %109 : vector<1x128xf32>
    %c16_i32_37 = arith.constant 16 : i32
    %111 = tpu.dynamic_rotate %108 by %c16_i32_37 dim 1 : vector<1x128xf32>, i32 -> vector<1x128xf32>
    %112 = arith.addf %108, %111 : vector<1x128xf32>
    %c16_i32_38 = arith.constant 16 : i32
    %113 = tpu.dynamic_rotate %110 by %c16_i32_38 dim 1 : vector<1x128xf32>, i32 -> vector<1x128xf32>
    %114 = arith.addf %110, %113 : vector<1x128xf32>
    %c32_i32_39 = arith.constant 32 : i32
    %115 = tpu.dynamic_rotate %112 by %c32_i32_39 dim 1 : vector<1x128xf32>, i32 -> vector<1x128xf32>
    %116 = arith.addf %112, %115 : vector<1x128xf32>
    %c32_i32_40 = arith.constant 32 : i32
    %117 = tpu.dynamic_rotate %114 by %c32_i32_40 dim 1 : vector<1x128xf32>, i32 -> vector<1x128xf32>
    %118 = arith.addf %114, %117 : vector<1x128xf32>
    %c64_i32_41 = arith.constant 64 : i32
    %119 = tpu.dynamic_rotate %116 by %c64_i32_41 dim 1 : vector<1x128xf32>, i32 -> vector<1x128xf32>
    %120 = arith.addf %116, %119 : vector<1x128xf32>
    %c64_i32_42 = arith.constant 64 : i32
    %121 = tpu.dynamic_rotate %118 by %c64_i32_42 dim 1 : vector<1x128xf32>, i32 -> vector<1x128xf32>
    %122 = arith.addf %118, %121 : vector<1x128xf32>
    %cst_43 = arith.constant 0.001953125 : f32
    %123 = vector.broadcast %cst_43 : f32 to vector<1x128xf32>
    %124 = arith.mulf %120, %123 : vector<1x128xf32>
    %cst_44 = arith.constant 0.001953125 : f32
    %125 = vector.broadcast %cst_44 : f32 to vector<1x128xf32>
    %126 = arith.mulf %122, %125 : vector<1x128xf32>
    %127 = arith.mulf %124, %124 : vector<1x128xf32>
    %128 = arith.subf %126, %127 : vector<1x128xf32>
    %cst_45 = arith.constant 9.99999974E-6 : f32
    %129 = vector.broadcast %cst_45 : f32 to vector<1x128xf32>
    %130 = arith.addf %128, %129 : vector<1x128xf32>
    %131 = math.rsqrt %130 : vector<1x128xf32>
    %c0_46 = arith.constant 0 : index
    %c0_47 = arith.constant 0 : index
    %132 = vector.load %arg7[%c0_46, %c0_47] : memref<1x128xf32, #tpu.memory_space<vmem>>, vector<1x128xf32>
    %133 = arith.mulf %132, %131 : vector<1x128xf32>
    %c0_48 = arith.constant 0 : index
    %c0_49 = arith.constant 0 : index
    %134 = vector.load %arg8[%c0_48, %c0_49] : memref<1x128xf32, #tpu.memory_space<vmem>>, vector<1x128xf32>
    %135 = arith.mulf %124, %133 : vector<1x128xf32>
    %136 = arith.subf %134, %135 : vector<1x128xf32>
    %137 = vector.broadcast %133 : vector<1x128xf32> to vector<32x128xf32>
    %138 = arith.mulf %101, %137 : vector<32x128xf32>
    %139 = vector.broadcast %136 : vector<1x128xf32> to vector<32x128xf32>
    %140 = arith.addf %138, %139 : vector<32x128xf32>
    %141 = arith.truncf %140 : vector<32x128xf32> to vector<32x128xbf16>
    %c0_50 = arith.constant 0 : index
    %c0_51 = arith.constant 0 : index
    %142 = vector.load %arg9[%c0_50, %c0_51] : memref<128x384xbf16, #tpu.memory_space<vmem>>, vector<128x384xbf16>
    %cst_52 = arith.constant dense<0.000000e+00> : vector<32x384xf32>
    %143 = tpu.matmul %141, %142, %cst_52 {dimension_numbers = #tpu.dot_dimension_numbers<[1], [0], [0], [1], [0, 0, 1, 1], [], []>} : vector<32x128xbf16>, vector<128x384xbf16>, vector<32x384xf32> -> vector<32x384xf32>
    %144 = vector.extract_strided_slice %143 {offsets = [0, 0], sizes = [32, 128], strides = [1, 1]} : vector<32x384xf32> to vector<32x128xf32>
    %145 = vector.extract_strided_slice %143 {offsets = [0, 128], sizes = [32, 128], strides = [1, 1]} : vector<32x384xf32> to vector<32x128xf32>
    %146 = vector.extract_strided_slice %143 {offsets = [0, 256], sizes = [32, 128], strides = [1, 1]} : vector<32x384xf32> to vector<32x128xf32>
    %c1_i32_53 = arith.constant 1 : i32
    %147 = tpu.dynamic_rotate %144 by %c1_i32_53 dim 0 : vector<32x128xf32>, i32 -> vector<32x128xf32>
    %148 = arith.mulf %147, %22 : vector<32x128xf32>
    %149 = arith.addf %145, %148 : vector<32x128xf32>
    %c31_i32_54 = arith.constant 31 : i32
    %150 = tpu.dynamic_rotate %146 by %c31_i32_54 dim 0 : vector<32x128xf32>, i32 -> vector<32x128xf32>
    %151 = arith.mulf %150, %28 : vector<32x128xf32>
    %152 = arith.addf %149, %151 : vector<32x128xf32>
    %c0_55 = arith.constant 0 : index
    %c0_56 = arith.constant 0 : index
    %153 = vector.load %arg10[%c0_55, %c0_56] : memref<1x128xf32, #tpu.memory_space<vmem>>, vector<1x128xf32>
    %154 = vector.broadcast %153 : vector<1x128xf32> to vector<32x128xf32>
    %155 = arith.addf %152, %154 : vector<32x128xf32>
    %cst_57 = arith.constant 0.000000e+00 : f32
    %156 = vector.broadcast %cst_57 : f32 to vector<32x128xf32>
    %157 = arith.maximumf %155, %156 : vector<32x128xf32>
    %cst_58 = arith.constant dense<0.000000e+00> : vector<128xf32>
    %158 = vector.multi_reduction <add>, %157, %cst_58 [0] : vector<32x128xf32> to vector<128xf32>
    %159 = vector.shape_cast %158 : vector<128xf32> to vector<1x128xf32>
    %160 = arith.mulf %157, %157 : vector<32x128xf32>
    %cst_59 = arith.constant dense<0.000000e+00> : vector<128xf32>
    %161 = vector.multi_reduction <add>, %160, %cst_59 [0] : vector<32x128xf32> to vector<128xf32>
    %162 = vector.shape_cast %161 : vector<128xf32> to vector<1x128xf32>
    %c8_i32_60 = arith.constant 8 : i32
    %163 = tpu.dynamic_rotate %159 by %c8_i32_60 dim 1 : vector<1x128xf32>, i32 -> vector<1x128xf32>
    %164 = arith.addf %159, %163 : vector<1x128xf32>
    %c8_i32_61 = arith.constant 8 : i32
    %165 = tpu.dynamic_rotate %162 by %c8_i32_61 dim 1 : vector<1x128xf32>, i32 -> vector<1x128xf32>
    %166 = arith.addf %162, %165 : vector<1x128xf32>
    %c16_i32_62 = arith.constant 16 : i32
    %167 = tpu.dynamic_rotate %164 by %c16_i32_62 dim 1 : vector<1x128xf32>, i32 -> vector<1x128xf32>
    %168 = arith.addf %164, %167 : vector<1x128xf32>
    %c16_i32_63 = arith.constant 16 : i32
    %169 = tpu.dynamic_rotate %166 by %c16_i32_63 dim 1 : vector<1x128xf32>, i32 -> vector<1x128xf32>
    %170 = arith.addf %166, %169 : vector<1x128xf32>
    %c32_i32_64 = arith.constant 32 : i32
    %171 = tpu.dynamic_rotate %168 by %c32_i32_64 dim 1 : vector<1x128xf32>, i32 -> vector<1x128xf32>
    %172 = arith.addf %168, %171 : vector<1x128xf32>
    %c32_i32_65 = arith.constant 32 : i32
    %173 = tpu.dynamic_rotate %170 by %c32_i32_65 dim 1 : vector<1x128xf32>, i32 -> vector<1x128xf32>
    %174 = arith.addf %170, %173 : vector<1x128xf32>
    %c64_i32_66 = arith.constant 64 : i32
    %175 = tpu.dynamic_rotate %172 by %c64_i32_66 dim 1 : vector<1x128xf32>, i32 -> vector<1x128xf32>
    %176 = arith.addf %172, %175 : vector<1x128xf32>
    %c64_i32_67 = arith.constant 64 : i32
    %177 = tpu.dynamic_rotate %174 by %c64_i32_67 dim 1 : vector<1x128xf32>, i32 -> vector<1x128xf32>
    %178 = arith.addf %174, %177 : vector<1x128xf32>
    %cst_68 = arith.constant 0.001953125 : f32
    %179 = vector.broadcast %cst_68 : f32 to vector<1x128xf32>
    %180 = arith.mulf %176, %179 : vector<1x128xf32>
    %cst_69 = arith.constant 0.001953125 : f32
    %181 = vector.broadcast %cst_69 : f32 to vector<1x128xf32>
    %182 = arith.mulf %178, %181 : vector<1x128xf32>
    %183 = arith.mulf %180, %180 : vector<1x128xf32>
    %184 = arith.subf %182, %183 : vector<1x128xf32>
    %cst_70 = arith.constant 9.99999974E-6 : f32
    %185 = vector.broadcast %cst_70 : f32 to vector<1x128xf32>
    %186 = arith.addf %184, %185 : vector<1x128xf32>
    %187 = math.rsqrt %186 : vector<1x128xf32>
    %c0_71 = arith.constant 0 : index
    %c0_72 = arith.constant 0 : index
    %188 = vector.load %arg11[%c0_71, %c0_72] : memref<1x128xf32, #tpu.memory_space<vmem>>, vector<1x128xf32>
    %189 = arith.mulf %188, %187 : vector<1x128xf32>
    %c0_73 = arith.constant 0 : index
    %c0_74 = arith.constant 0 : index
    %190 = vector.load %arg12[%c0_73, %c0_74] : memref<1x128xf32, #tpu.memory_space<vmem>>, vector<1x128xf32>
    %191 = arith.mulf %180, %189 : vector<1x128xf32>
    %192 = arith.subf %190, %191 : vector<1x128xf32>
    %193 = vector.broadcast %189 : vector<1x128xf32> to vector<32x128xf32>
    %194 = arith.mulf %157, %193 : vector<32x128xf32>
    %195 = vector.broadcast %192 : vector<1x128xf32> to vector<32x128xf32>
    %196 = arith.addf %194, %195 : vector<32x128xf32>
    %c0_75 = arith.constant 0 : index
    %c0_76 = arith.constant 0 : index
    %197 = vector.load %arg13[%c0_75, %c0_76] : memref<32x128xf32, #tpu.memory_space<vmem>>, vector<32x128xf32>
    tpu.vector_store %arg13[%c0_75, %c0_76], %196 {strides = array<i32>} : memref<32x128xf32, #tpu.memory_space<vmem>>, vector<32x128xf32>,
    return
  }
}

</mosaic_0001>

<llo_original>
// kernel: tile.48
$region0: #{tile.48}
  #allocation0 [shape = 's32[1]{0}', space=sflag, size = 0x4, scoped, tag = 'scoped memory for tile.48']
  %s0 = inlined_call_operand.vmem [shape: f32[8], index: 0, kind: input, shape index: {}]
  %s1 = inlined_call_operand.vmem [shape: f32[16,8], index: 1, kind: output, shape index: {}]
  // Predicated region
  $region2: #{tile.48} parent=0 // pred_check
    _
  $region3: #{tile.48} parent=0 // pred_check_branch
    %3 = sbr.rel (0) target = $region5
  $region4: #{tile.48} parent=0 // pred_region
    _
  $region5: #{tile.48} parent=0 // pred_fallthru
    _
  %v4 = vld [vmem:[%s0] ss:$0 sm:$0xff]
  %5 = vst [vmem:[%s1] sm:$0xff] %v4
  %s6 = scalar_lea.vmem %s1, 8
  %7 = vst [vmem:[%s6] sm:$0xff] %v4

// kernel: tile.49
$region0: #{tile.49}
  %s0 = inlined_call_operand.vmem [shape: f32[16,8], index: 0, kind: input, shape index: {}]
  %s1 = inlined_call_operand.vmem [shape: f32[1,128], index: 1, kind: output, shape index: {}]
  $region1: #{tile.49} parent=0
    #allocation0 [shape = 'u8[4096]{0}', space=vmem, size = 0x1000, scoped, tag = 'scoped mem for output reshape']
    %v2 = vld [vmem:[%s0] sm:$0x1]
    %vm3 = vcmask 64512
    %4 = vst.msk [vmem:[#allocation0] sm:$0x1] %vm3, %v2
    %s5 = scalar_lea.vmem %s0, 15
    %v6 = vld [vmem:[%s5] sm:$0x1]
    %7 = vrot.lane.b32.xlu0 %v6, 120
    %v8 = vpop.permute.xlu0 %7
    %vm9 = vcmask 1048512
    %10 = vst.msk [vmem:[#allocation0] sm:$0x1] %vm9, %v8
    %s11 = scalar_lea.vmem %s0, 14
    %v12 = vld [vmem:[%s11] sm:$0x1]
    %13 = vrot.lane.b32.xlu0 %v12, 112
    %v14 = vpop.permute.xlu0 %13
    %vm15 = vcmask 982912
    %16 = vst.msk [vmem:[#allocation0] sm:$0x1] %vm15, %v14
    %s17 = scalar_lea.vmem %s0, 13
    %v18 = vld [vmem:[%s17] sm:$0x1]
    %19 = vrot.lane.b32.xlu0 %v18, 104
    %v20 = vpop.permute.xlu0 %19
    %vm21 = vcmask 917312
    %22 = vst.msk [vmem:[#allocation0] sm:$0x1] %vm21, %v20
    %s23 = scalar_lea.vmem %s0, 12
    %v24 = vld [vmem:[%s23] sm:$0x1]
    %25 = vrot.lane.b32.xlu0 %v24, 96
    %v26 = vpop.permute.xlu0 %25
    %vm27 = vcmask 851712
    %28 = vst.msk [vmem:[#allocation0] sm:$0x1] %vm27, %v26
    %s29 = scalar_lea.vmem %s0, 11
    %v30 = vld [vmem:[%s29] sm:$0x1]
    %31 = vrot.lane.b32.xlu0 %v30, 88
    %v32 = vpop.permute.xlu0 %31
    %vm33 = vcmask 786112
    %34 = vst.msk [vmem:[#allocation0] sm:$0x1] %vm33, %v32
    %s35 = scalar_lea.vmem %s0, 10
    %v36 = vld [vmem:[%s35] sm:$0x1]
    %37 = vrot.lane.b32.xlu0 %v36, 80
    %v38 = vpop.permute.xlu0 %37
    %vm39 = vcmask 720512
    %40 = vst.msk [vmem:[#allocation0] sm:$0x1] %vm39, %v38
    %s41 = scalar_lea.vmem %s0, 9
    %v42 = vld [vmem:[%s41] sm:$0x1]
    %43 = vrot.lane.b32.xlu0 %v42, 72
    %v44 = vpop.permute.xlu0 %43
    %vm45 = vcmask 654912
    %46 = vst.msk [vmem:[#allocation0] sm:$0x1] %vm45, %v44
    %s47 = scalar_lea.vmem %s0, 8
    %v48 = vld [vmem:[%s47] sm:$0x1]
    %49 = vrot.lane.b32.xlu0 %v48, 64
    %v50 = vpop.permute.xlu0 %49
    %vm51 = vcmask 589312
    %52 = vst.msk [vmem:[#allocation0] sm:$0x1] %vm51, %v50
    %s53 = scalar_lea.vmem %s0, 7
    %v54 = vld [vmem:[%s53] sm:$0x1]
    %55 = vrot.lane.b32.xlu0 %v54, 56
    %v56 = vpop.permute.xlu0 %55
    %vm57 = vcmask 523712
    %58 = vst.msk [vmem:[#allocation0] sm:$0x1] %vm57, %v56
    %s59 = scalar_lea.vmem %s0, 6
    %v60 = vld [vmem:[%s59] sm:$0x1]
    %61 = vrot.lane.b32.xlu0 %v60, 48
    %v62 = vpop.permute.xlu0 %61
    %vm63 = vcmask 458112
    %64 = vst.msk [vmem:[#allocation0] sm:$0x1] %vm63, %v62
    %s65 = scalar_lea.vmem %s0, 5
    %v66 = vld [vmem:[%s65] sm:$0x1]
    %67 = vrot.lane.b32.xlu0 %v66, 40
    %v68 = vpop.permute.xlu0 %67
    %vm69 = vcmask 392512
    %70 = vst.msk [vmem:[#allocation0] sm:$0x1] %vm69, %v68
    %s71 = scalar_lea.vmem %s0, 4
    %v72 = vld [vmem:[%s71] sm:$0x1]
    %73 = vrot.lane.b32.xlu0 %v72, 32
    %v74 = vpop.permute.xlu0 %73
    %vm75 = vcmask 326912
    %76 = vst.msk [vmem:[#allocation0] sm:$0x1] %vm75, %v74
    %s77 = scalar_lea.vmem %s0, 3
    %v78 = vld [vmem:[%s77] sm:$0x1]
    %79 = vrot.lane.b32.xlu0 %v78, 24
    %v80 = vpop.permute.xlu0 %79
    %vm81 = vcmask 261312
    %82 = vst.msk [vmem:[#allocation0] sm:$0x1] %vm81, %v80
    %s83 = scalar_lea.vmem %s0, 2
    %v84 = vld [vmem:[%s83] sm:$0x1]
    %85 = vrot.lane.b32.xlu0 %v84, 16
    %v86 = vpop.permute.xlu0 %85
    %vm87 = vcmask 195712
    %88 = vst.msk [vmem:[#allocation0] sm:$0x1] %vm87, %v86
    %s89 = scalar_lea.vmem %s0, 1
    %v90 = vld [vmem:[%s89] sm:$0x1]
    %91 = vrot.lane.b32.xlu0 %v90, 8
    %v92 = vpop.permute.xlu0 %91
    %vm93 = vcmask 130112
    %94 = vst.msk [vmem:[#allocation0] sm:$0x1] %vm93, %v92
    %s96 = sshllo.u32 0, 1
    %v98 = vld [vmem:[#allocation0] sm:%s96]
    %s99 = sshllo.u32 0, 1
    %100 = vst [vmem:[%s1] sm:%s99] %v98

// kernel: _convblock_forward.1
$region0: #{_convblock_forward.1}
  #allocation0 [shape = 'u32[]', space=smem, size = 0x4, offset = 0x4, fixed_abs, tag = 'smem constant byte address 0x4 - core index']
  #allocation1 [shape = 'u32[144,128]{1,0:T(1,128)}', space=vmem, size = 0x12000, scoped, tag = 'internal scratch']
  %s0 = inlined_call_operand.vmem [shape: bf16[32,64], index: 0, kind: input, shape index: {}]
  %s1 = inlined_call_operand.vmem [shape: bf16[64,384], index: 1, kind: input, shape index: {}]
  %s2 = inlined_call_operand.vmem [shape: f32[1,128], index: 2, kind: input, shape index: {}]
  %s3 = inlined_call_operand.vmem [shape: f32[1,128], index: 3, kind: input, shape index: {}]
  %s4 = inlined_call_operand.vmem [shape: f32[1,128], index: 4, kind: input, shape index: {}]
  %s5 = inlined_call_operand.vmem [shape: bf16[128,384], index: 5, kind: input, shape index: {}]
  %s6 = inlined_call_operand.vmem [shape: f32[1,128], index: 6, kind: input, shape index: {}]
  %s7 = inlined_call_operand.vmem [shape: f32[1,128], index: 7, kind: input, shape index: {}]
  %s8 = inlined_call_operand.vmem [shape: f32[1,128], index: 8, kind: input, shape index: {}]
  %s9 = inlined_call_operand.vmem [shape: bf16[128,384], index: 9, kind: input, shape index: {}]
  %s10 = inlined_call_operand.vmem [shape: f32[1,128], index: 10, kind: input, shape index: {}]
  %s11 = inlined_call_operand.vmem [shape: f32[1,128], index: 11, kind: input, shape index: {}]
  %s12 = inlined_call_operand.vmem [shape: f32[1,128], index: 12, kind: input, shape index: {}]
  %s13 = inlined_call_operand.vmem [shape: f32[32,128], index: 13, kind: output, shape index: {}]
  %s14 = sld [smem:[#allocation0]]
  $region62: #{_convblock_forward.1} parent=0
    _
  %s16 = ssub.s32 1, %s14
  %s17 = scalar_select 0, %s16, %s14
  // Predicated region
  $region2: #{_convblock_forward.1} parent=0 // pred_check
    _
  $region3: #{_convblock_forward.1} parent=0 // pred_check_branch
    %19 = sbr.rel (0) target = $region5
  $region4: #{_convblock_forward.1} parent=0 // pred_region
    _
  $region5: #{_convblock_forward.1} parent=0 // pred_fallthru
    _
  // Predicated region
  $region6: #{_convblock_forward.1} parent=0 // pred_check
    _
  $region7: #{_convblock_forward.1} parent=0 // pred_check_branch
    %21 = sbr.rel (0) target = $region9
  $region8: #{_convblock_forward.1} parent=0 // pred_region
    _
  $region9: #{_convblock_forward.1} parent=0 // pred_fallthru
    _
  // Predicated region
  $region10: #{_convblock_forward.1} parent=0 // pred_check
    _
  $region11: #{_convblock_forward.1} parent=0 // pred_check_branch
    %23 = sbr.rel (0) target = $region13
  $region12: #{_convblock_forward.1} parent=0 // pred_region
    _
  $region13: #{_convblock_forward.1} parent=0 // pred_fallthru
    _
  // Predicated region
  $region14: #{_convblock_forward.1} parent=0 // pred_check
    _
  $region15: #{_convblock_forward.1} parent=0 // pred_check_branch
    %25 = sbr.rel (0) target = $region17
  $region16: #{_convblock_forward.1} parent=0 // pred_region
    _
  $region17: #{_convblock_forward.1} parent=0 // pred_fallthru
    _
  // Predicated region
  $region18: #{_convblock_forward.1} parent=0 // pred_check
    _
  $region19: #{_convblock_forward.1} parent=0 // pred_check_branch
    %27 = sbr.rel (0) target = $region21
  $region20: #{_convblock_forward.1} parent=0 // pred_region
    _
  $region21: #{_convblock_forward.1} parent=0 // pred_fallthru
    _
  // Predicated region
  $region22: #{_convblock_forward.1} parent=0 // pred_check
    _
  $region23: #{_convblock_forward.1} parent=0 // pred_check_branch
    %29 = sbr.rel (0) target = $region25
  $region24: #{_convblock_forward.1} parent=0 // pred_region
    _
  $region25: #{_convblock_forward.1} parent=0 // pred_fallthru
    _
  // Predicated region
  $region26: #{_convblock_forward.1} parent=0 // pred_check
    _
  $region27: #{_convblock_forward.1} parent=0 // pred_check_branch
    %31 = sbr.rel (0) target = $region29
  $region28: #{_convblock_forward.1} parent=0 // pred_region
    _
  $region29: #{_convblock_forward.1} parent=0 // pred_fallthru
    _
  // Predicated region
  $region30: #{_convblock_forward.1} parent=0 // pred_check
    _
  $region31: #{_convblock_forward.1} parent=0 // pred_check_branch
    %33 = sbr.rel (0) target = $region33
  $region32: #{_convblock_forward.1} parent=0 // pred_region
    _
  $region33: #{_convblock_forward.1} parent=0 // pred_fallthru
    _
  // Predicated region
  $region34: #{_convblock_forward.1} parent=0 // pred_check
    _
  $region35: #{_convblock_forward.1} parent=0 // pred_check_branch
    %35 = sbr.rel (0) target = $region37
  $region36: #{_convblock_forward.1} parent=0 // pred_region
    _
  $region37: #{_convblock_forward.1} parent=0 // pred_fallthru
    _
  // Predicated region
  $region38: #{_convblock_forward.1} parent=0 // pred_check
    _
  $region39: #{_convblock_forward.1} parent=0 // pred_check_branch
    %37 = sbr.rel (0) target = $region41
  $region40: #{_convblock_forward.1} parent=0 // pred_region
    _
  $region41: #{_convblock_forward.1} parent=0 // pred_fallthru
    _
  // Predicated region
  $region42: #{_convblock_forward.1} parent=0 // pred_check
    _
  $region43: #{_convblock_forward.1} parent=0 // pred_check_branch
    %39 = sbr.rel (0) target = $region45
  $region44: #{_convblock_forward.1} parent=0 // pred_region
    _
  $region45: #{_convblock_forward.1} parent=0 // pred_fallthru
    _
  // Predicated region
  $region46: #{_convblock_forward.1} parent=0 // pred_check
    _
  $region47: #{_convblock_forward.1} parent=0 // pred_check_branch
    %41 = sbr.rel (0) target = $region49
  $region48: #{_convblock_forward.1} parent=0 // pred_region
    _
  $region49: #{_convblock_forward.1} parent=0 // pred_fallthru
    _
  // Predicated region
  $region50: #{_convblock_forward.1} parent=0 // pred_check
    _
  $region51: #{_convblock_forward.1} parent=0 // pred_check_branch
    %43 = sbr.rel (0) target = $region53
  $region52: #{_convblock_forward.1} parent=0 // pred_region
    _
  $region53: #{_convblock_forward.1} parent=0 // pred_fallthru
    _
  %v45 = vlaneseq
  %v46 = vshrl.u32 %v45, 7
  %v47 = vadd.s32 %v46, 8
  %v48 = vadd.s32 %v46, 16
  %v49 = vadd.s32 %v46, 24
  %vm50 = vcmp.lt.s32.totalorder %v46, 0
  %v51 = vsub.s32 0, %v46
  %v52 = vsel %vm50, %v51, %v46
  %v53 = vshrl.u32 %v52, 4
  %v54 = vand.u32 %v52, 15
  %v55 = vsub.s32 0, %v54
  %v56 = vsel %vm50, %v55, %v54
  %vm57 = vcmp.lt.s32.totalorder %v47, 0
  %v58 = vsub.s32 0, %v47
  %v59 = vsel %vm57, %v58, %v47
  %v60 = vshrl.u32 %v59, 4
  %v61 = vand.u32 %v59, 15
  %v62 = vsub.s32 0, %v61
  %v63 = vsel %vm57, %v62, %v61
  %vm64 = vcmp.lt.s32.totalorder %v48, 0
  %v65 = vsub.s32 0, %v48
  %v66 = vsel %vm64, %v65, %v48
  %v67 = vshrl.u32 %v66, 4
  %v68 = vand.u32 %v66, 15
  %v69 = vsub.s32 0, %v68
  %v70 = vsel %vm64, %v69, %v68
  %vm71 = vcmp.lt.s32.totalorder %v49, 0
  %v72 = vsub.s32 0, %v49
  %v73 = vsel %vm71, %v72, %v49
  %v74 = vshrl.u32 %v73, 4
  %v75 = vand.u32 %v73, 15
  %v76 = vsub.s32 0, %v75
  %v77 = vsel %vm71, %v76, %v75
  %vm78 = vcmp.ne.s32.totalorder %v56, 0
  %vm79 = vcmp.ne.s32.totalorder %v63, 0
  %vm80 = vcmp.ne.s32.totalorder %v70, 0
  %vm81 = vcmp.ne.s32.totalorder %v77, 0
  %vm82 = vcmp.lt.s32.totalorder %v56, 0
  %vm83 = vcmp.lt.s32.totalorder %v63, 0
  %vm84 = vcmp.lt.s32.totalorder %v70, 0
  %vm85 = vcmp.lt.s32.totalorder %v77, 0
  %vm86 = vmand %vm82, %vm78
  %vm87 = vmand %vm83, %vm79
  %vm88 = vmand %vm84, %vm80
  %vm89 = vmand %vm85, %vm81
  %v90 = vadd.s32 %v56, 16
  %v91 = vadd.s32 %v63, 16
  %v92 = vadd.s32 %v70, 16
  %v93 = vadd.s32 %v77, 16
  %v94 = vsel %vm86, %v90, %v56
  %v95 = vsel %vm87, %v91, %v63
  %v96 = vsel %vm88, %v92, %v70
  %v97 = vsel %vm89, %v93, %v77
  %vm98 = vcmp.ge.s32.totalorder %v94, 1
  %vm99 = vcmp.ge.s32.totalorder %v95, 1
  %vm100 = vcmp.ge.s32.totalorder %v96, 1
  %vm101 = vcmp.ge.s32.totalorder %v97, 1
  %v102 = vsel %vm98, 1, 0
  %v103 = vsel %vm99, 1, 0
  %v104 = vsel %vm100, 1, 0
  %v105 = vsel %vm101, 1, 0
  %v106 = vcvt.s32.f32 %v102
  %v107 = vcvt.s32.f32 %v103
  %v108 = vcvt.s32.f32 %v104
  %v109 = vcvt.s32.f32 %v105
  %vm110 = vcmp.le.s32.totalorder %v94, 14
  %vm111 = vcmp.le.s32.totalorder %v95, 14
  %vm112 = vcmp.le.s32.totalorder %v96, 14
  %vm113 = vcmp.le.s32.totalorder %v97, 14
  %v114 = vsel %vm110, 1, 0
  %v115 = vsel %vm111, 1, 0
  %v116 = vsel %vm112, 1, 0
  %v117 = vsel %vm113, 1, 0
  %v118 = vcvt.s32.f32 %v114
  %v119 = vcvt.s32.f32 %v115
  %v120 = vcvt.s32.f32 %v116
  %v121 = vcvt.s32.f32 %v117
  %v122 = vld [vmem:[%s0] sm:$0xf]
  %v123 = vld [vmem:[%s0 + $0x4] sm:$0xf]
  %v124 = vld [vmem:[%s0 + $0x8] sm:$0xf]
  %v125 = vld [vmem:[%s0 + $0xc] sm:$0xf]
  %v126 = vld [vmem:[%s1] sm:$0xff]
  %v127 = vld [vmem:[%s1 + $0x8] sm:$0xf]
  %v128 = vld [vmem:[%s1 + $0xc] sm:$0xff]
  %v129 = vld [vmem:[%s1 + $0x14] sm:$0xf]
  %v130 = vld [vmem:[%s1 + $0x18] sm:$0xff]
  %v131 = vld [vmem:[%s1 + $0x20] sm:$0xf]
  %v132 = vld [vmem:[%s1 + $0x24] sm:$0xff]
  %v133 = vld [vmem:[%s1 + $0x2c] sm:$0xf]
  %v134 = vld [vmem:[%s1 + $0x30] sm:$0xff]
  %v135 = vld [vmem:[%s1 + $0x38] sm:$0xf]
  %v136 = vld [vmem:[%s1 + $0x3c] sm:$0xff]
  %v137 = vld [vmem:[%s1 + $0x44] sm:$0xf]
  %v138 = vld [vmem:[%s1 + $0x48] sm:$0xff]
  %v139 = vld [vmem:[%s1 + $0x50] sm:$0xf]
  %v140 = vld [vmem:[%s1 + $0x54] sm:$0xff]
  %v141 = vld [vmem:[%s1 + $0x5c] sm:$0xf]
  %v146 = vunpack.c.l.b16 %v122
  %v147 = vunpack.c.l.b16 %v123
  %v148 = vunpack.c.l.b16 %v124
  %v149 = vunpack.c.l.b16 %v125
  %v150 = vpack.c.b16 %v147, %v146
  %v151 = vpack.c.b16 %v149, %v148
  %v168 = vunpack.c.l.b16 %v126
  %v169 = vunpack.c.h.b16 %v126
  %v170 = vunpack.c.l.b16 %v127
  %v171 = vunpack.c.l.b16 %v128
  %v172 = vunpack.c.h.b16 %v128
  %v173 = vunpack.c.l.b16 %v129
  %v174 = vunpack.c.l.b16 %v130
  %v175 = vunpack.c.h.b16 %v130
  %v176 = vunpack.c.l.b16 %v131
  %v177 = vunpack.c.l.b16 %v132
  %v178 = vunpack.c.h.b16 %v132
  %v179 = vunpack.c.l.b16 %v133
  %v180 = vunpack.c.l.b16 %v134
  %v181 = vunpack.c.h.b16 %v134
  %v182 = vunpack.c.l.b16 %v135
  %v183 = vunpack.c.l.b16 %v136
  %v184 = vunpack.c.h.b16 %v136
  %v185 = vunpack.c.l.b16 %v137
  %v186 = vunpack.c.l.b16 %v138
  %v187 = vunpack.c.h.b16 %v138
  %v188 = vunpack.c.l.b16 %v139
  %v189 = vunpack.c.l.b16 %v140
  %v190 = vunpack.c.h.b16 %v140
  %v191 = vunpack.c.l.b16 %v141
  %v192 = vpack.c.b16 %v171, %v168
  %v193 = vpack.c.b16 %v172, %v169
  %v194 = vpack.c.b16 %v173, %v170
  %v195 = vpack.c.b16 %v177, %v174
  %v196 = vpack.c.b16 %v178, %v175
  %v197 = vpack.c.b16 %v179, %v176
  %v198 = vpack.c.b16 %v183, %v180
  %v199 = vpack.c.b16 %v184, %v181
  %v200 = vpack.c.b16 %v185, %v182
  %v201 = vpack.c.b16 %v189, %v186
  %v202 = vpack.c.b16 %v190, %v187
  %v203 = vpack.c.b16 %v191, %v188
  %vm216 = vcmask 523264
  %v218 = vsel %vm216, %v150, 0
  %v221 = vsel %vm216, %v151, 0
  %223 = vmatprep.subr.bf16.mxu0 %v193
  %224 = vmatpush1.bf16.msra.mxu0 %v192
  %225 = vmatprep.subr.bf16.mxu0 %v196
  %226 = vmatpush1.bf16.msra.mxu0 %v195
  %227 = vmatprep.subr.bf16.mxu0 %v199
  %228 = vmatpush1.bf16.msra.mxu0 %v198
  %229 = vmatprep.subr.bf16.mxu0 %v202
  %230 = vmatpush1.bf16.msra.mxu0 %v201
  %231 = vmatprep.subr.bf16.mxu0 0
  %232 = vmatpush1.bf16.msra.mxu0 0
  %233 = vmatprep.subr.bf16.mxu0 0
  %234 = vmatpush1.bf16.msra.mxu0 0
  %235 = vmatprep.subr.bf16.mxu0 0
  %236 = vmatpush1.bf16.msra.mxu0 0
  %237 = vmatprep.subr.bf16.mxu0 0
  %238 = vmatpush1.bf16.msra.mxu0 0
  %239 = vmatprep.subr.bf16.mxu0 0
  %240 = vmatpush1.bf16.msra.mxu0 0
  %241 = vmatprep.subr.bf16.mxu0 0
  %242 = vmatpush1.bf16.msra.mxu0 0
  %243 = vmatprep.subr.bf16.mxu0 0
  %244 = vmatpush1.bf16.msra.mxu0 0
  %245 = vmatprep.subr.bf16.mxu0 0
  %246 = vmatpush1.bf16.msra.mxu0 0
  %247 = vmatprep.subr.bf16.mxu0 0
  %248 = vmatpush1.bf16.msra.mxu0 0
  %249 = vmatprep.subr.bf16.mxu0 0
  %250 = vmatpush1.bf16.msra.mxu0 0
  %251 = vmatprep.subr.bf16.mxu0 0
  %252 = vmatpush1.bf16.msra.mxu0 0
  %253 = vmatprep.subr.bf16.mxu0 0
  %254 = vmatpush1.bf16.msra.mxu0 0
  %255 = vmatprep.mubr.bf16.mxu0 0
  %256 = vmatmul.mubr.bf16.gmra.mrb[0].mxu0 %v218
  %v257 = vpop.f32.mrb[0].mxu0
  %v258 = vadd.f32 0.0, %v257
  %v259 = vpop.f32.mrb[0].mxu0
  %v260 = vadd.f32 0.0, %v259
  %v261 = vpop.f32.mrb[0].mxu0
  %v262 = vadd.f32 0.0, %v261
  %v263 = vpop.f32.mrb[0].mxu0
  %v264 = vadd.f32 0.0, %v263
  %265 = vmatprep.mubr.bf16.mxu0 0
  %266 = vmatmul.mubr.bf16.gmra.mrb[0].mxu0 %v221
  %v267 = vpop.f32.mrb[0].mxu0
  %v268 = vadd.f32 0.0, %v267
  %v269 = vpop.f32.mrb[0].mxu0
  %v270 = vadd.f32 0.0, %v269
  %v271 = vpop.f32.mrb[0].mxu0
  %v272 = vadd.f32 0.0, %v271
  %v273 = vpop.f32.mrb[0].mxu0
  %v274 = vadd.f32 0.0, %v273
  %275 = vdwg.mxu0
  %276 = vmatprep.subr.bf16.mxu0 0
  %277 = vmatpush1.bf16.msra.mxu0 %v194
  %278 = vmatprep.subr.bf16.mxu0 0
  %279 = vmatpush1.bf16.msra.mxu0 %v197
  %280 = vmatprep.subr.bf16.mxu0 0
  %281 = vmatpush1.bf16.msra.mxu0 %v200
  %282 = vmatprep.subr.bf16.mxu0 0
  %283 = vmatpush1.bf16.msra.mxu0 %v203
  %284 = vmatprep.subr.bf16.mxu0 0
  %285 = vmatpush1.bf16.msra.mxu0 0
  %286 = vmatprep.subr.bf16.mxu0 0
  %287 = vmatpush1.bf16.msra.mxu0 0
  %288 = vmatprep.subr.bf16.mxu0 0
  %289 = vmatpush1.bf16.msra.mxu0 0
  %290 = vmatprep.subr.bf16.mxu0 0
  %291 = vmatpush1.bf16.msra.mxu0 0
  %292 = vmatprep.subr.bf16.mxu0 0
  %293 = vmatpush1.bf16.msra.mxu0 0
  %294 = vmatprep.subr.bf16.mxu0 0
  %295 = vmatpush1.bf16.msra.mxu0 0
  %296 = vmatprep.subr.bf16.mxu0 0
  %297 = vmatpush1.bf16.msra.mxu0 0
  %298 = vmatprep.subr.bf16.mxu0 0
  %299 = vmatpush1.bf16.msra.mxu0 0
  %300 = vmatprep.subr.bf16.mxu0 0
  %301 = vmatpush1.bf16.msra.mxu0 0
  %302 = vmatprep.subr.bf16.mxu0 0
  %303 = vmatpush1.bf16.msra.mxu0 0
  %304 = vmatprep.subr.bf16.mxu0 0
  %305 = vmatpush1.bf16.msra.mxu0 0
  %306 = vmatprep.subr.bf16.mxu0 0
  %307 = vmatpush1.bf16.msra.mxu0 0
  %308 = vmatprep.mubr.bf16.mxu0 0
  %309 = vmatmul.mubr.bf16.gmra.mrb[0].mxu0 %v218
  %v310 = vpop.f32.mrb[0].mxu0
  %v311 = vadd.f32 0.0, %v310
  %v312 = vpop.f32.mrb[0].mxu0
  %v313 = vpop.f32.mrb[0].mxu0
  %v314 = vadd.f32 0.0, %v313
  %v315 = vpop.f32.mrb[0].mxu0
  %316 = vmatprep.mubr.bf16.mxu0 0
  %317 = vmatmul.mubr.bf16.gmra.mrb[0].mxu0 %v221
  %v318 = vpop.f32.mrb[0].mxu0
  %v319 = vadd.f32 0.0, %v318
  %v320 = vpop.f32.mrb[0].mxu0
  %v321 = vpop.f32.mrb[0].mxu0
  %v322 = vadd.f32 0.0, %v321
  %v323 = vpop.f32.mrb[0].mxu0
  %324 = vdwg.mxu0
  %v325 = vrot.slane %v258, 7
  %v326 = vrot.slane %v262, 7
  %v327 = vrot.slane %v268, 7
  %v328 = vrot.slane %v272, 7
  %vm329 = vcmp.lt.s32.totalorder %v46, 1
  %v330 = vsel %vm329, %v327, %v328
  %v331 = vsel %vm329, %v326, %v327
  %v332 = vsel %vm329, %v325, %v326
  %v333 = vsel %vm329, %v328, %v325
  %v334 = vmul.f32 %v333, %v106
  %v335 = vmul.f32 %v332, %v107
  %v336 = vmul.f32 %v331, %v108
  %v337 = vmul.f32 %v330, %v109
  %v338 = vadd.f32 %v260, %v334
  %v339 = vadd.f32 %v264, %v335
  %v340 = vadd.f32 %v270, %v336
  %v341 = vadd.f32 %v274, %v337
  %v342 = vrot.slane %v311, 1
  %v343 = vrot.slane %v314, 1
  %v344 = vrot.slane %v319, 1
  %v345 = vrot.slane %v322, 1
  %vm346 = vcmp.lt.s32.totalorder %v46, 7
  %v347 = vsel %vm346, %v344, %v345
  %v348 = vsel %vm346, %v343, %v344
  %v349 = vsel %vm346, %v342, %v343
  %v350 = vsel %vm346, %v345, %v342
  %v351 = vmul.f32 %v349, %v118
  %v352 = vmul.f32 %v348, %v119
  %v353 = vmul.f32 %v347, %v120
  %v354 = vmul.f32 %v350, %v121
  %v355 = vadd.f32 %v338, %v351
  %v356 = vadd.f32 %v339, %v352
  %v357 = vadd.f32 %v340, %v353
  %v358 = vadd.f32 %v341, %v354
  %v359 = vld [vmem:[%s2] sm:$0x1]
  %v361 = vlaneseq
  %v362 = vshrl.u32 %v361, 7
  %v363 = vsub.s32 0, %v362
  %v364 = vrot.slane %v359, %v363
  %v366 = vadd.f32 %v355, %v364
  %v367 = vadd.f32 %v356, %v364
  %v368 = vadd.f32 %v357, %v364
  %v369 = vadd.f32 %v358, %v364
  %v370 = vmax.f32 %v366, 0.0
  %v371 = vmax.f32 %v367, 0.0
  %v372 = vmax.f32 %v368, 0.0
  %v373 = vmax.f32 %v369, 0.0
  %v374 = vadd.f32 %v370, %v371
  %v375 = vadd.f32 %v374, %v372
  %v376 = vadd.f32 %v375, %v373
  %v377 = vrot.slane %v376, 4
  %v378 = vadd.f32 %v376, %v377
  %v379 = vrot.slane %v378, 2
  %v380 = vadd.f32 %v378, %v379
  %v381 = vrot.slane %v380, 1
  %v382 = vadd.f32 %v380, %v381
  %v383 = vmul.f32 %v370, %v370
  %v384 = vmul.f32 %v371, %v371
  %v385 = vmul.f32 %v372, %v372
  %v386 = vmul.f32 %v373, %v373
  %v387 = vadd.f32 %v383, %v384
  %v388 = vadd.f32 %v387, %v385
  %v389 = vadd.f32 %v388, %v386
  %v390 = vrot.slane %v389, 4
  %v391 = vadd.f32 %v389, %v390
  %v392 = vrot.slane %v391, 2
  %v393 = vadd.f32 %v391, %v392
  %v394 = vrot.slane %v393, 1
  %v395 = vadd.f32 %v393, %v394
  %396 = vrot.lane.b32.xlu0 %v382, 8
  %v397 = vpop.permute.xlu0 %396
  %v398 = vadd.f32 %v382, %v397
  %399 = vrot.lane.b32.xlu0 %v395, 8
  %v400 = vpop.permute.xlu0 %399
  %v401 = vadd.f32 %v395, %v400
  %402 = vrot.lane.b32.xlu0 %v398, 16
  %v403 = vpop.permute.xlu0 %402
  %v404 = vadd.f32 %v398, %v403
  %405 = vrot.lane.b32.xlu0 %v401, 16
  %v406 = vpop.permute.xlu0 %405
  %v407 = vadd.f32 %v401, %v406
  %408 = vrot.lane.b32.xlu0 %v404, 32
  %v409 = vpop.permute.xlu0 %408
  %v410 = vadd.f32 %v404, %v409
  %411 = vrot.lane.b32.xlu0 %v407, 32
  %v412 = vpop.permute.xlu0 %411
  %v413 = vadd.f32 %v407, %v412
  %414 = vrot.lane.b32.xlu0 %v410, 64
  %v415 = vpop.permute.xlu0 %414
  %v416 = vadd.f32 %v410, %v415
  %417 = vrot.lane.b32.xlu0 %v413, 64
  %v418 = vpop.permute.xlu0 %417
  %v419 = vadd.f32 %v413, %v418
  %v420 = vmul.f32 %v416, 0.001953125
  %v421 = vmul.f32 %v419, 0.001953125
  %v422 = vmul.f32 %v420, %v420
  %v423 = vsub.f32 %v421, %v422
  %v424 = vadd.f32 %v423, 1e-05
  %v425 = vrsqrt.pop %v424
  %v426 = vld [vmem:[%s3] sm:$0x1]
  %v427 = vmul.f32 %v426, %v425
  %v428 = vld [vmem:[%s4] sm:$0x1]
  %v429 = vmul.f32 %v420, %v427
  %v430 = vsub.f32 %v428, %v429
  %v432 = vlaneseq
  %v433 = vshrl.u32 %v432, 7
  %v434 = vsub.s32 0, %v433
  %v435 = vrot.slane %v427, %v434
  %v437 = vmul.f32 %v370, %v435
  %v438 = vmul.f32 %v371, %v435
  %v439 = vmul.f32 %v372, %v435
  %v440 = vmul.f32 %v373, %v435
  %v442 = vlaneseq
  %v443 = vshrl.u32 %v442, 7
  %v444 = vsub.s32 0, %v443
  %v445 = vrot.slane %v430, %v444
  %v447 = vadd.f32 %v437, %v445
  %v448 = vadd.f32 %v438, %v445
  %v449 = vadd.f32 %v439, %v445
  %v450 = vadd.f32 %v440, %v445
  %v451 = vpack.c.bf16 %v448, %v447
  %v452 = vpack.c.bf16 %v450, %v449
  %v453 = vld [vmem:[%s5] sm:$0xff]
  %v454 = vld [vmem:[%s5 + $0x8] sm:$0xf]
  %v455 = vld [vmem:[%s5 + $0xc] sm:$0xff]
  %v456 = vld [vmem:[%s5 + $0x14] sm:$0xf]
  %v457 = vld [vmem:[%s5 + $0x18] sm:$0xff]
  %v458 = vld [vmem:[%s5 + $0x20] sm:$0xf]
  %v459 = vld [vmem:[%s5 + $0x24] sm:$0xff]
  %v460 = vld [vmem:[%s5 + $0x2c] sm:$0xf]
  %v461 = vld [vmem:[%s5 + $0x30] sm:$0xff]
  %v462 = vld [vmem:[%s5 + $0x38] sm:$0xf]
  %v463 = vld [vmem:[%s5 + $0x3c] sm:$0xff]
  %v464 = vld [vmem:[%s5 + $0x44] sm:$0xf]
  %v465 = vld [vmem:[%s5 + $0x48] sm:$0xff]
  %v466 = vld [vmem:[%s5 + $0x50] sm:$0xf]
  %v467 = vld [vmem:[%s5 + $0x54] sm:$0xff]
  %v468 = vld [vmem:[%s5 + $0x5c] sm:$0xf]
  %v469 = vld [vmem:[%s5 + $0x60] sm:$0xff]
  %v470 = vld [vmem:[%s5 + $0x68] sm:$0xf]
  %v471 = vld [vmem:[%s5 + $0x6c] sm:$0xff]
  %v472 = vld [vmem:[%s5 + $0x74] sm:$0xf]
  %v473 = vld [vmem:[%s5 + $0x78] sm:$0xff]
  %v474 = vld [vmem:[%s5 + $0x80] sm:$0xf]
  %v475 = vld [vmem:[%s5 + $0x84] sm:$0xff]
  %v476 = vld [vmem:[%s5 + $0x8c] sm:$0xf]
  %v477 = vld [vmem:[%s5 + $0x90] sm:$0xff]
  %v478 = vld [vmem:[%s5 + $0x98] sm:$0xf]
  %v479 = vld [vmem:[%s5 + $0x9c] sm:$0xff]
  %v480 = vld [vmem:[%s5 + $0xa4] sm:$0xf]
  %v481 = vld [vmem:[%s5 + $0xa8] sm:$0xff]
  %v482 = vld [vmem:[%s5 + $0xb0] sm:$0xf]
  %v483 = vld [vmem:[%s5 + $0xb4] sm:$0xff]
  %v484 = vld [vmem:[%s5 + $0xbc] sm:$0xf]
  %v517 = vunpack.c.l.b16 %v453
  %v518 = vunpack.c.h.b16 %v453
  %v519 = vunpack.c.l.b16 %v454
  %v520 = vunpack.c.l.b16 %v455
  %v521 = vunpack.c.h.b16 %v455
  %v522 = vunpack.c.l.b16 %v456
  %v523 = vunpack.c.l.b16 %v457
  %v524 = vunpack.c.h.b16 %v457
  %v525 = vunpack.c.l.b16 %v458
  %v526 = vunpack.c.l.b16 %v459
  %v527 = vunpack.c.h.b16 %v459
  %v528 = vunpack.c.l.b16 %v460
  %v529 = vunpack.c.l.b16 %v461
  %v530 = vunpack.c.h.b16 %v461
  %v531 = vunpack.c.l.b16 %v462
  %v532 = vunpack.c.l.b16 %v463
  %v533 = vunpack.c.h.b16 %v463
  %v534 = vunpack.c.l.b16 %v464
  %v535 = vunpack.c.l.b16 %v465
  %v536 = vunpack.c.h.b16 %v465
  %v537 = vunpack.c.l.b16 %v466
  %v538 = vunpack.c.l.b16 %v467
  %v539 = vunpack.c.h.b16 %v467
  %v540 = vunpack.c.l.b16 %v468
  %v541 = vunpack.c.l.b16 %v469
  %v542 = vunpack.c.h.b16 %v469
  %v543 = vunpack.c.l.b16 %v470
  %v544 = vunpack.c.l.b16 %v471
  %v545 = vunpack.c.h.b16 %v471
  %v546 = vunpack.c.l.b16 %v472
  %v547 = vunpack.c.l.b16 %v473
  %v548 = vunpack.c.h.b16 %v473
  %v549 = vunpack.c.l.b16 %v474
  %v550 = vunpack.c.l.b16 %v475
  %v551 = vunpack.c.h.b16 %v475
  %v552 = vunpack.c.l.b16 %v476
  %v553 = vunpack.c.l.b16 %v477
  %v554 = vunpack.c.h.b16 %v477
  %v555 = vunpack.c.l.b16 %v478
  %v556 = vunpack.c.l.b16 %v479
  %v557 = vunpack.c.h.b16 %v479
  %v558 = vunpack.c.l.b16 %v480
  %v559 = vunpack.c.l.b16 %v481
  %v560 = vunpack.c.h.b16 %v481
  %v561 = vunpack.c.l.b16 %v482
  %v562 = vunpack.c.l.b16 %v483
  %v563 = vunpack.c.h.b16 %v483
  %v564 = vunpack.c.l.b16 %v484
  %v565 = vpack.c.b16 %v520, %v517
  %v566 = vpack.c.b16 %v521, %v518
  %v567 = vpack.c.b16 %v522, %v519
  %v568 = vpack.c.b16 %v526, %v523
  %v569 = vpack.c.b16 %v527, %v524
  %v570 = vpack.c.b16 %v528, %v525
  %v571 = vpack.c.b16 %v532, %v529
  %v572 = vpack.c.b16 %v533, %v530
  %v573 = vpack.c.b16 %v534, %v531
  %v574 = vpack.c.b16 %v538, %v535
  %v575 = vpack.c.b16 %v539, %v536
  %v576 = vpack.c.b16 %v540, %v537
  %v577 = vpack.c.b16 %v544, %v541
  %v578 = vpack.c.b16 %v545, %v542
  %v579 = vpack.c.b16 %v546, %v543
  %v580 = vpack.c.b16 %v550, %v547
  %v581 = vpack.c.b16 %v551, %v548
  %v582 = vpack.c.b16 %v552, %v549
  %v583 = vpack.c.b16 %v556, %v553
  %v584 = vpack.c.b16 %v557, %v554
  %v585 = vpack.c.b16 %v558, %v555
  %v586 = vpack.c.b16 %v562, %v559
  %v587 = vpack.c.b16 %v563, %v560
  %v588 = vpack.c.b16 %v564, %v561
  %613 = vmatprep.subr.bf16.mxu0 %v566
  %614 = vmatpush1.bf16.msra.mxu0 %v565
  %615 = vmatprep.subr.bf16.mxu0 %v569
  %616 = vmatpush1.bf16.msra.mxu0 %v568
  %617 = vmatprep.subr.bf16.mxu0 %v572
  %618 = vmatpush1.bf16.msra.mxu0 %v571
  %619 = vmatprep.subr.bf16.mxu0 %v575
  %620 = vmatpush1.bf16.msra.mxu0 %v574
  %621 = vmatprep.subr.bf16.mxu0 %v578
  %622 = vmatpush1.bf16.msra.mxu0 %v577
  %623 = vmatprep.subr.bf16.mxu0 %v581
  %624 = vmatpush1.bf16.msra.mxu0 %v580
  %625 = vmatprep.subr.bf16.mxu0 %v584
  %626 = vmatpush1.bf16.msra.mxu0 %v583
  %627 = vmatprep.subr.bf16.mxu0 %v587
  %628 = vmatpush1.bf16.msra.mxu0 %v586
  %629 = vmatprep.subr.bf16.mxu0 0
  %630 = vmatpush1.bf16.msra.mxu0 0
  %631 = vmatprep.subr.bf16.mxu0 0
  %632 = vmatpush1.bf16.msra.mxu0 0
  %633 = vmatprep.subr.bf16.mxu0 0
  %634 = vmatpush1.bf16.msra.mxu0 0
  %635 = vmatprep.subr.bf16.mxu0 0
  %636 = vmatpush1.bf16.msra.mxu0 0
  %637 = vmatprep.subr.bf16.mxu0 0
  %638 = vmatpush1.bf16.msra.mxu0 0
  %639 = vmatprep.subr.bf16.mxu0 0
  %640 = vmatpush1.bf16.msra.mxu0 0
  %641 = vmatprep.subr.bf16.mxu0 0
  %642 = vmatpush1.bf16.msra.mxu0 0
  %643 = vmatprep.subr.bf16.mxu0 0
  %644 = vmatpush1.bf16.msra.mxu0 0
  %645 = vmatprep.mubr.bf16.mxu0 0
  %646 = vmatmul.mubr.bf16.gmra.mrb[0].mxu0 %v451
  %v647 = vpop.f32.mrb[0].mxu0
  %v648 = vadd.f32 0.0, %v647
  %v649 = vpop.f32.mrb[0].mxu0
  %v650 = vadd.f32 0.0, %v649
  %v651 = vpop.f32.mrb[0].mxu0
  %v652 = vadd.f32 0.0, %v651
  %v653 = vpop.f32.mrb[0].mxu0
  %v654 = vadd.f32 0.0, %v653
  %655 = vmatprep.mubr.bf16.mxu0 0
  %656 = vmatmul.mubr.bf16.gmra.mrb[0].mxu0 %v452
  %v657 = vpop.f32.mrb[0].mxu0
  %v658 = vadd.f32 0.0, %v657
  %v659 = vpop.f32.mrb[0].mxu0
  %v660 = vadd.f32 0.0, %v659
  %v661 = vpop.f32.mrb[0].mxu0
  %v662 = vadd.f32 0.0, %v661
  %v663 = vpop.f32.mrb[0].mxu0
  %v664 = vadd.f32 0.0, %v663
  %665 = vdwg.mxu0
  %666 = vmatprep.subr.bf16.mxu0 0
  %667 = vmatpush1.bf16.msra.mxu0 %v567
  %668 = vmatprep.subr.bf16.mxu0 0
  %669 = vmatpush1.bf16.msra.mxu0 %v570
  %670 = vmatprep.subr.bf16.mxu0 0
  %671 = vmatpush1.bf16.msra.mxu0 %v573
  %672 = vmatprep.subr.bf16.mxu0 0
  %673 = vmatpush1.bf16.msra.mxu0 %v576
  %674 = vmatprep.subr.bf16.mxu0 0
  %675 = vmatpush1.bf16.msra.mxu0 %v579
  %676 = vmatprep.subr.bf16.mxu0 0
  %677 = vmatpush1.bf16.msra.mxu0 %v582
  %678 = vmatprep.subr.bf16.mxu0 0
  %679 = vmatpush1.bf16.msra.mxu0 %v585
  %680 = vmatprep.subr.bf16.mxu0 0
  %681 = vmatpush1.bf16.msra.mxu0 %v588
  %682 = vmatprep.subr.bf16.mxu0 0
  %683 = vmatpush1.bf16.msra.mxu0 0
  %684 = vmatprep.subr.bf16.mxu0 0
  %685 = vmatpush1.bf16.msra.mxu0 0
  %686 = vmatprep.subr.bf16.mxu0 0
  %687 = vmatpush1.bf16.msra.mxu0 0
  %688 = vmatprep.subr.bf16.mxu0 0
  %689 = vmatpush1.bf16.msra.mxu0 0
  %690 = vmatprep.subr.bf16.mxu0 0
  %691 = vmatpush1.bf16.msra.mxu0 0
  %692 = vmatprep.subr.bf16.mxu0 0
  %693 = vmatpush1.bf16.msra.mxu0 0
  %694 = vmatprep.subr.bf16.mxu0 0
  %695 = vmatpush1.bf16.msra.mxu0 0
  %696 = vmatprep.subr.bf16.mxu0 0
  %697 = vmatpush1.bf16.msra.mxu0 0
  %698 = vmatprep.mubr.bf16.mxu0 0
  %699 = vmatmul.mubr.bf16.gmra.mrb[0].mxu0 %v451
  %v700 = vpop.f32.mrb[0].mxu0
  %v701 = vadd.f32 0.0, %v700
  %v702 = vpop.f32.mrb[0].mxu0
  %v703 = vpop.f32.mrb[0].mxu0
  %v704 = vadd.f32 0.0, %v703
  %v705 = vpop.f32.mrb[0].mxu0
  %706 = vmatprep.mubr.bf16.mxu0 0
  %707 = vmatmul.mubr.bf16.gmra.mrb[0].mxu0 %v452
  %v708 = vpop.f32.mrb[0].mxu0
  %v709 = vadd.f32 0.0, %v708
  %v710 = vpop.f32.mrb[0].mxu0
  %v711 = vpop.f32.mrb[0].mxu0
  %v712 = vadd.f32 0.0, %v711
  %v713 = vpop.f32.mrb[0].mxu0
  %714 = vdwg.mxu0
  %v715 = vrot.slane %v648, 7
  %v716 = vrot.slane %v652, 7
  %v717 = vrot.slane %v658, 7
  %v718 = vrot.slane %v662, 7
  %v719 = vsel %vm329, %v717, %v718
  %v720 = vsel %vm329, %v716, %v717
  %v721 = vsel %vm329, %v715, %v716
  %v722 = vsel %vm329, %v718, %v715
  %v723 = vmul.f32 %v722, %v106
  %v724 = vmul.f32 %v721, %v107
  %v725 = vmul.f32 %v720, %v108
  %v726 = vmul.f32 %v719, %v109
  %v727 = vadd.f32 %v650, %v723
  %v728 = vadd.f32 %v654, %v724
  %v729 = vadd.f32 %v660, %v725
  %v730 = vadd.f32 %v664, %v726
  %v731 = vrot.slane %v701, 1
  %v732 = vrot.slane %v704, 1
  %v733 = vrot.slane %v709, 1
  %v734 = vrot.slane %v712, 1
  %v735 = vsel %vm346, %v733, %v734
  %v736 = vsel %vm346, %v732, %v733
  %v737 = vsel %vm346, %v731, %v732
  %v738 = vsel %vm346, %v734, %v731
  %v739 = vmul.f32 %v737, %v118
  %v740 = vmul.f32 %v736, %v119
  %v741 = vmul.f32 %v735, %v120
  %v742 = vmul.f32 %v738, %v121
  %v743 = vadd.f32 %v727, %v739
  %v744 = vadd.f32 %v728, %v740
  %v745 = vadd.f32 %v729, %v741
  %v746 = vadd.f32 %v730, %v742
  %v747 = vld [vmem:[%s6] sm:$0x1]
  %v749 = vlaneseq
  %v750 = vshrl.u32 %v749, 7
  %v751 = vsub.s32 0, %v750
  %v752 = vrot.slane %v747, %v751
  %v754 = vadd.f32 %v743, %v752
  %v755 = vadd.f32 %v744, %v752
  %v756 = vadd.f32 %v745, %v752
  %v757 = vadd.f32 %v746, %v752
  %v758 = vmax.f32 %v754, 0.0
  %v759 = vmax.f32 %v755, 0.0
  %v760 = vmax.f32 %v756, 0.0
  %v761 = vmax.f32 %v757, 0.0
  %v762 = vadd.f32 %v758, %v759
  %v763 = vadd.f32 %v762, %v760
  %v764 = vadd.f32 %v763, %v761
  %v765 = vrot.slane %v764, 4
  %v766 = vadd.f32 %v764, %v765
  %v767 = vrot.slane %v766, 2
  %v768 = vadd.f32 %v766, %v767
  %v769 = vrot.slane %v768, 1
  %v770 = vadd.f32 %v768, %v769
  %v771 = vmul.f32 %v758, %v758
  %v772 = vmul.f32 %v759, %v759
  %v773 = vmul.f32 %v760, %v760
  %v774 = vmul.f32 %v761, %v761
  %v775 = vadd.f32 %v771, %v772
  %v776 = vadd.f32 %v775, %v773
  %v777 = vadd.f32 %v776, %v774
  %v778 = vrot.slane %v777, 4
  %v779 = vadd.f32 %v777, %v778
  %v780 = vrot.slane %v779, 2
  %v781 = vadd.f32 %v779, %v780
  %v782 = vrot.slane %v781, 1
  %v783 = vadd.f32 %v781, %v782
  %784 = vrot.lane.b32.xlu0 %v770, 8
  %v785 = vpop.permute.xlu0 %784
  %v786 = vadd.f32 %v770, %v785
  %787 = vrot.lane.b32.xlu0 %v783, 8
  %v788 = vpop.permute.xlu0 %787
  %v789 = vadd.f32 %v783, %v788
  %790 = vrot.lane.b32.xlu0 %v786, 16
  %v791 = vpop.permute.xlu0 %790
  %v792 = vadd.f32 %v786, %v791
  %793 = vrot.lane.b32.xlu0 %v789, 16
  %v794 = vpop.permute.xlu0 %793
  %v795 = vadd.f32 %v789, %v794
  %796 = vrot.lane.b32.xlu0 %v792, 32
  %v797 = vpop.permute.xlu0 %796
  %v798 = vadd.f32 %v792, %v797
  %799 = vrot.lane.b32.xlu0 %v795, 32
  %v800 = vpop.permute.xlu0 %799
  %v801 = vadd.f32 %v795, %v800
  %802 = vrot.lane.b32.xlu0 %v798, 64
  %v803 = vpop.permute.xlu0 %802
  %v804 = vadd.f32 %v798, %v803
  %805 = vrot.lane.b32.xlu0 %v801, 64
  %v806 = vpop.permute.xlu0 %805
  %v807 = vadd.f32 %v801, %v806
  %v808 = vmul.f32 %v804, 0.001953125
  %v809 = vmul.f32 %v807, 0.001953125
  %v810 = vmul.f32 %v808, %v808
  %v811 = vsub.f32 %v809, %v810
  %v812 = vadd.f32 %v811, 1e-05
  %v813 = vrsqrt.pop %v812
  %v814 = vld [vmem:[%s7] sm:$0x1]
  %v815 = vmul.f32 %v814, %v813
  %v816 = vld [vmem:[%s8] sm:$0x1]
  %v817 = vmul.f32 %v808, %v815
  %v818 = vsub.f32 %v816, %v817
  %v820 = vlaneseq
  %v821 = vshrl.u32 %v820, 7
  %v822 = vsub.s32 0, %v821
  %v823 = vrot.slane %v815, %v822
  %v825 = vmul.f32 %v758, %v823
  %v826 = vmul.f32 %v759, %v823
  %v827 = vmul.f32 %v760, %v823
  %v828 = vmul.f32 %v761, %v823
  %v830 = vlaneseq
  %v831 = vshrl.u32 %v830, 7
  %v832 = vsub.s32 0, %v831
  %v833 = vrot.slane %v818, %v832
  %v835 = vadd.f32 %v825, %v833
  %v836 = vadd.f32 %v826, %v833
  %v837 = vadd.f32 %v827, %v833
  %v838 = vadd.f32 %v828, %v833
  %v839 = vpack.c.bf16 %v836, %v835
  %v840 = vpack.c.bf16 %v838, %v837
  %v841 = vld [vmem:[%s9] sm:$0xff]
  %v842 = vld [vmem:[%s9 + $0x8] sm:$0xf]
  %v843 = vld [vmem:[%s9 + $0xc] sm:$0xff]
  %v844 = vld [vmem:[%s9 + $0x14] sm:$0xf]
  %v845 = vld [vmem:[%s9 + $0x18] sm:$0xff]
  %v846 = vld [vmem:[%s9 + $0x20] sm:$0xf]
  %v847 = vld [vmem:[%s9 + $0x24] sm:$0xff]
  %v848 = vld [vmem:[%s9 + $0x2c] sm:$0xf]
  %v849 = vld [vmem:[%s9 + $0x30] sm:$0xff]
  %v850 = vld [vmem:[%s9 + $0x38] sm:$0xf]
  %v851 = vld [vmem:[%s9 + $0x3c] sm:$0xff]
  %v852 = vld [vmem:[%s9 + $0x44] sm:$0xf]
  %v853 = vld [vmem:[%s9 + $0x48] sm:$0xff]
  %v854 = vld [vmem:[%s9 + $0x50] sm:$0xf]
  %v855 = vld [vmem:[%s9 + $0x54] sm:$0xff]
  %v856 = vld [vmem:[%s9 + $0x5c] sm:$0xf]
  %v857 = vld [vmem:[%s9 + $0x60] sm:$0xff]
  %v858 = vld [vmem:[%s9 + $0x68] sm:$0xf]
  %v859 = vld [vmem:[%s9 + $0x6c] sm:$0xff]
  %v860 = vld [vmem:[%s9 + $0x74] sm:$0xf]
  %v861 = vld [vmem:[%s9 + $0x78] sm:$0xff]
  %v862 = vld [vmem:[%s9 + $0x80] sm:$0xf]
  %v863 = vld [vmem:[%s9 + $0x84] sm:$0xff]
  %v864 = vld [vmem:[%s9 + $0x8c] sm:$0xf]
  %v865 = vld [vmem:[%s9 + $0x90] sm:$0xff]
  %v866 = vld [vmem:[%s9 + $0x98] sm:$0xf]
  %v867 = vld [vmem:[%s9 + $0x9c] sm:$0xff]
  %v868 = vld [vmem:[%s9 + $0xa4] sm:$0xf]
  %v869 = vld [vmem:[%s9 + $0xa8] sm:$0xff]
  %v870 = vld [vmem:[%s9 + $0xb0] sm:$0xf]
  %v871 = vld [vmem:[%s9 + $0xb4] sm:$0xff]
  %v872 = vld [vmem:[%s9 + $0xbc] sm:$0xf]
  %v905 = vunpack.c.l.b16 %v841
  %v906 = vunpack.c.h.b16 %v841
  %v907 = vunpack.c.l.b16 %v842
  %v908 = vunpack.c.l.b16 %v843
  %v909 = vunpack.c.h.b16 %v843
  %v910 = vunpack.c.l.b16 %v844
  %v911 = vunpack.c.l.b16 %v845
  %v912 = vunpack.c.h.b16 %v845
  %v913 = vunpack.c.l.b16 %v846
  %v914 = vunpack.c.l.b16 %v847
  %v915 = vunpack.c.h.b16 %v847
  %v916 = vunpack.c.l.b16 %v848
  %v917 = vunpack.c.l.b16 %v849
  %v918 = vunpack.c.h.b16 %v849
  %v919 = vunpack.c.l.b16 %v850
  %v920 = vunpack.c.l.b16 %v851
  %v921 = vunpack.c.h.b16 %v851
  %v922 = vunpack.c.l.b16 %v852
  %v923 = vunpack.c.l.b16 %v853
  %v924 = vunpack.c.h.b16 %v853
  %v925 = vunpack.c.l.b16 %v854
  %v926 = vunpack.c.l.b16 %v855
  %v927 = vunpack.c.h.b16 %v855
  %v928 = vunpack.c.l.b16 %v856
  %v929 = vunpack.c.l.b16 %v857
  %v930 = vunpack.c.h.b16 %v857
  %v931 = vunpack.c.l.b16 %v858
  %v932 = vunpack.c.l.b16 %v859
  %v933 = vunpack.c.h.b16 %v859
  %v934 = vunpack.c.l.b16 %v860
  %v935 = vunpack.c.l.b16 %v861
  %v936 = vunpack.c.h.b16 %v861
  %v937 = vunpack.c.l.b16 %v862
  %v938 = vunpack.c.l.b16 %v863
  %v939 = vunpack.c.h.b16 %v863
  %v940 = vunpack.c.l.b16 %v864
  %v941 = vunpack.c.l.b16 %v865
  %v942 = vunpack.c.h.b16 %v865
  %v943 = vunpack.c.l.b16 %v866
  %v944 = vunpack.c.l.b16 %v867
  %v945 = vunpack.c.h.b16 %v867
  %v946 = vunpack.c.l.b16 %v868
  %v947 = vunpack.c.l.b16 %v869
  %v948 = vunpack.c.h.b16 %v869
  %v949 = vunpack.c.l.b16 %v870
  %v950 = vunpack.c.l.b16 %v871
  %v951 = vunpack.c.h.b16 %v871
  %v952 = vunpack.c.l.b16 %v872
  %v953 = vpack.c.b16 %v908, %v905
  %v954 = vpack.c.b16 %v909, %v906
  %v955 = vpack.c.b16 %v910, %v907
  %v956 = vpack.c.b16 %v914, %v911
  %v957 = vpack.c.b16 %v915, %v912
  %v958 = vpack.c.b16 %v916, %v913
  %v959 = vpack.c.b16 %v920, %v917
  %v960 = vpack.c.b16 %v921, %v918
  %v961 = vpack.c.b16 %v922, %v919
  %v962 = vpack.c.b16 %v926, %v923
  %v963 = vpack.c.b16 %v927, %v924
  %v964 = vpack.c.b16 %v928, %v925
  %v965 = vpack.c.b16 %v932, %v929
  %v966 = vpack.c.b16 %v933, %v930
  %v967 = vpack.c.b16 %v934, %v931
  %v968 = vpack.c.b16 %v938, %v935
  %v969 = vpack.c.b16 %v939, %v936
  %v970 = vpack.c.b16 %v940, %v937
  %v971 = vpack.c.b16 %v944, %v941
  %v972 = vpack.c.b16 %v945, %v942
  %v973 = vpack.c.b16 %v946, %v943
  %v974 = vpack.c.b16 %v950, %v947
  %v975 = vpack.c.b16 %v951, %v948
  %v976 = vpack.c.b16 %v952, %v949
  %1001 = vmatprep.subr.bf16.mxu0 %v954
  %1002 = vmatpush1.bf16.msra.mxu0 %v953
  %1003 = vmatprep.subr.bf16.mxu0 %v957
  %1004 = vmatpush1.bf16.msra.mxu0 %v956
  %1005 = vmatprep.subr.bf16.mxu0 %v960
  %1006 = vmatpush1.bf16.msra.mxu0 %v959
  %1007 = vmatprep.subr.bf16.mxu0 %v963
  %1008 = vmatpush1.bf16.msra.mxu0 %v962
  %1009 = vmatprep.subr.bf16.mxu0 %v966
  %1010 = vmatpush1.bf16.msra.mxu0 %v965
  %1011 = vmatprep.subr.bf16.mxu0 %v969
  %1012 = vmatpush1.bf16.msra.mxu0 %v968
  %1013 = vmatprep.subr.bf16.mxu0 %v972
  %1014 = vmatpush1.bf16.msra.mxu0 %v971
  %1015 = vmatprep.subr.bf16.mxu0 %v975
  %1016 = vmatpush1.bf16.msra.mxu0 %v974
  %1017 = vmatprep.subr.bf16.mxu0 0
  %1018 = vmatpush1.bf16.msra.mxu0 0
  %1019 = vmatprep.subr.bf16.mxu0 0
  %1020 = vmatpush1.bf16.msra.mxu0 0
  %1021 = vmatprep.subr.bf16.mxu0 0
  %1022 = vmatpush1.bf16.msra.mxu0 0
  %1023 = vmatprep.subr.bf16.mxu0 0
  %1024 = vmatpush1.bf16.msra.mxu0 0
  %1025 = vmatprep.subr.bf16.mxu0 0
  %1026 = vmatpush1.bf16.msra.mxu0 0
  %1027 = vmatprep.subr.bf16.mxu0 0
  %1028 = vmatpush1.bf16.msra.mxu0 0
  %1029 = vmatprep.subr.bf16.mxu0 0
  %1030 = vmatpush1.bf16.msra.mxu0 0
  %1031 = vmatprep.subr.bf16.mxu0 0
  %1032 = vmatpush1.bf16.msra.mxu0 0
  %1033 = vmatprep.mubr.bf16.mxu0 0
  %1034 = vmatmul.mubr.bf16.gmra.mrb[0].mxu0 %v839
  %v1035 = vpop.f32.mrb[0].mxu0
  %v1036 = vadd.f32 0.0, %v1035
  %v1037 = vpop.f32.mrb[0].mxu0
  %v1038 = vadd.f32 0.0, %v1037
  %v1039 = vpop.f32.mrb[0].mxu0
  %v1040 = vadd.f32 0.0, %v1039
  %v1041 = vpop.f32.mrb[0].mxu0
  %v1042 = vadd.f32 0.0, %v1041
  %1043 = vmatprep.mubr.bf16.mxu0 0
  %1044 = vmatmul.mubr.bf16.gmra.mrb[0].mxu0 %v840
  %v1045 = vpop.f32.mrb[0].mxu0
  %v1046 = vadd.f32 0.0, %v1045
  %v1047 = vpop.f32.mrb[0].mxu0
  %v1048 = vadd.f32 0.0, %v1047
  %v1049 = vpop.f32.mrb[0].mxu0
  %v1050 = vadd.f32 0.0, %v1049
  %v1051 = vpop.f32.mrb[0].mxu0
  %v1052 = vadd.f32 0.0, %v1051
  %1053 = vdwg.mxu0
  %1054 = vmatprep.subr.bf16.mxu0 0
  %1055 = vmatpush1.bf16.msra.mxu0 %v955
  %1056 = vmatprep.subr.bf16.mxu0 0
  %1057 = vmatpush1.bf16.msra.mxu0 %v958
  %1058 = vmatprep.subr.bf16.mxu0 0
  %1059 = vmatpush1.bf16.msra.mxu0 %v961
  %1060 = vmatprep.subr.bf16.mxu0 0
  %1061 = vmatpush1.bf16.msra.mxu0 %v964
  %1062 = vmatprep.subr.bf16.mxu0 0
  %1063 = vmatpush1.bf16.msra.mxu0 %v967
  %1064 = vmatprep.subr.bf16.mxu0 0
  %1065 = vmatpush1.bf16.msra.mxu0 %v970
  %1066 = vmatprep.subr.bf16.mxu0 0
  %1067 = vmatpush1.bf16.msra.mxu0 %v973
  %1068 = vmatprep.subr.bf16.mxu0 0
  %1069 = vmatpush1.bf16.msra.mxu0 %v976
  %1070 = vmatprep.subr.bf16.mxu0 0
  %1071 = vmatpush1.bf16.msra.mxu0 0
  %1072 = vmatprep.subr.bf16.mxu0 0
  %1073 = vmatpush1.bf16.msra.mxu0 0
  %1074 = vmatprep.subr.bf16.mxu0 0
  %1075 = vmatpush1.bf16.msra.mxu0 0
  %1076 = vmatprep.subr.bf16.mxu0 0
  %1077 = vmatpush1.bf16.msra.mxu0 0
  %1078 = vmatprep.subr.bf16.mxu0 0
  %1079 = vmatpush1.bf16.msra.mxu0 0
  %1080 = vmatprep.subr.bf16.mxu0 0
  %1081 = vmatpush1.bf16.msra.mxu0 0
  %1082 = vmatprep.subr.bf16.mxu0 0
  %1083 = vmatpush1.bf16.msra.mxu0 0
  %1084 = vmatprep.subr.bf16.mxu0 0
  %1085 = vmatpush1.bf16.msra.mxu0 0
  %1086 = vmatprep.mubr.bf16.mxu0 0
  %1087 = vmatmul.mubr.bf16.gmra.mrb[0].mxu0 %v839
  %v1088 = vpop.f32.mrb[0].mxu0
  %v1089 = vadd.f32 0.0, %v1088
  %v1090 = vpop.f32.mrb[0].mxu0
  %v1091 = vpop.f32.mrb[0].mxu0
  %v1092 = vadd.f32 0.0, %v1091
  %v1093 = vpop.f32.mrb[0].mxu0
  %1094 = vmatprep.mubr.bf16.mxu0 0
  %1095 = vmatmul.mubr.bf16.gmra.mrb[0].mxu0 %v840
  %v1096 = vpop.f32.mrb[0].mxu0
  %v1097 = vadd.f32 0.0, %v1096
  %v1098 = vpop.f32.mrb[0].mxu0
  %v1099 = vpop.f32.mrb[0].mxu0
  %v1100 = vadd.f32 0.0, %v1099
  %v1101 = vpop.f32.mrb[0].mxu0
  %1102 = vdwg.mxu0
  %v1103 = vrot.slane %v1036, 7
  %v1104 = vrot.slane %v1040, 7
  %v1105 = vrot.slane %v1046, 7
  %v1106 = vrot.slane %v1050, 7
  %v1107 = vsel %vm329, %v1105, %v1106
  %v1108 = vsel %vm329, %v1104, %v1105
  %v1109 = vsel %vm329, %v1103, %v1104
  %v1110 = vsel %vm329, %v1106, %v1103
  %v1111 = vmul.f32 %v1110, %v106
  %v1112 = vmul.f32 %v1109, %v107
  %v1113 = vmul.f32 %v1108, %v108
  %v1114 = vmul.f32 %v1107, %v109
  %v1115 = vadd.f32 %v1038, %v1111
  %v1116 = vadd.f32 %v1042, %v1112
  %v1117 = vadd.f32 %v1048, %v1113
  %v1118 = vadd.f32 %v1052, %v1114
  %v1119 = vrot.slane %v1089, 1
  %v1120 = vrot.slane %v1092, 1
  %v1121 = vrot.slane %v1097, 1
  %v1122 = vrot.slane %v1100, 1
  %v1123 = vsel %vm346, %v1121, %v1122
  %v1124 = vsel %vm346, %v1120, %v1121
  %v1125 = vsel %vm346, %v1119, %v1120
  %v1126 = vsel %vm346, %v1122, %v1119
  %v1127 = vmul.f32 %v1125, %v118
  %v1128 = vmul.f32 %v1124, %v119
  %v1129 = vmul.f32 %v1123, %v120
  %v1130 = vmul.f32 %v1126, %v121
  %v1131 = vadd.f32 %v1115, %v1127
  %v1132 = vadd.f32 %v1116, %v1128
  %v1133 = vadd.f32 %v1117, %v1129
  %v1134 = vadd.f32 %v1118, %v1130
  %v1135 = vld [vmem:[%s10] sm:$0x1]
  %v1137 = vlaneseq
  %v1138 = vshrl.u32 %v1137, 7
  %v1139 = vsub.s32 0, %v1138
  %v1140 = vrot.slane %v1135, %v1139
  %v1142 = vadd.f32 %v1131, %v1140
  %v1143 = vadd.f32 %v1132, %v1140
  %v1144 = vadd.f32 %v1133, %v1140
  %v1145 = vadd.f32 %v1134, %v1140
  %v1146 = vmax.f32 %v1142, 0.0
  %v1147 = vmax.f32 %v1143, 0.0
  %v1148 = vmax.f32 %v1144, 0.0
  %v1149 = vmax.f32 %v1145, 0.0
  %v1150 = vadd.f32 %v1146, %v1147
  %v1151 = vadd.f32 %v1150, %v1148
  %v1152 = vadd.f32 %v1151, %v1149
  %v1153 = vrot.slane %v1152, 4
  %v1154 = vadd.f32 %v1152, %v1153
  %v1155 = vrot.slane %v1154, 2
  %v1156 = vadd.f32 %v1154, %v1155
  %v1157 = vrot.slane %v1156, 1
  %v1158 = vadd.f32 %v1156, %v1157
  %v1159 = vmul.f32 %v1146, %v1146
  %v1160 = vmul.f32 %v1147, %v1147
  %v1161 = vmul.f32 %v1148, %v1148
  %v1162 = vmul.f32 %v1149, %v1149
  %v1163 = vadd.f32 %v1159, %v1160
  %v1164 = vadd.f32 %v1163, %v1161
  %v1165 = vadd.f32 %v1164, %v1162
  %v1166 = vrot.slane %v1165, 4
  %v1167 = vadd.f32 %v1165, %v1166
  %v1168 = vrot.slane %v1167, 2
  %v1169 = vadd.f32 %v1167, %v1168
  %v1170 = vrot.slane %v1169, 1
  %v1171 = vadd.f32 %v1169, %v1170
  %1172 = vrot.lane.b32.xlu0 %v1158, 8
  %v1173 = vpop.permute.xlu0 %1172
  %v1174 = vadd.f32 %v1158, %v1173
  %1175 = vrot.lane.b32.xlu0 %v1171, 8
  %v1176 = vpop.permute.xlu0 %1175
  %v1177 = vadd.f32 %v1171, %v1176
  %1178 = vrot.lane.b32.xlu0 %v1174, 16
  %v1179 = vpop.permute.xlu0 %1178
  %v1180 = vadd.f32 %v1174, %v1179
  %1181 = vrot.lane.b32.xlu0 %v1177, 16
  %v1182 = vpop.permute.xlu0 %1181
  %v1183 = vadd.f32 %v1177, %v1182
  %1184 = vrot.lane.b32.xlu0 %v1180, 32
  %v1185 = vpop.permute.xlu0 %1184
  %v1186 = vadd.f32 %v1180, %v1185
  %1187 = vrot.lane.b32.xlu0 %v1183, 32
  %v1188 = vpop.permute.xlu0 %1187
  %v1189 = vadd.f32 %v1183, %v1188
  %1190 = vrot.lane.b32.xlu0 %v1186, 64
  %v1191 = vpop.permute.xlu0 %1190
  %v1192 = vadd.f32 %v1186, %v1191
  %1193 = vrot.lane.b32.xlu0 %v1189, 64
  %v1194 = vpop.permute.xlu0 %1193
  %v1195 = vadd.f32 %v1189, %v1194
  %v1196 = vmul.f32 %v1192, 0.001953125
  %v1197 = vmul.f32 %v1195, 0.001953125
  %v1198 = vmul.f32 %v1196, %v1196
  %v1199 = vsub.f32 %v1197, %v1198
  %v1200 = vadd.f32 %v1199, 1e-05
  %v1201 = vrsqrt.pop %v1200
  %v1202 = vld [vmem:[%s11] sm:$0x1]
  %v1203 = vmul.f32 %v1202, %v1201
  %v1204 = vld [vmem:[%s12] sm:$0x1]
  %v1205 = vmul.f32 %v1196, %v1203
  %v1206 = vsub.f32 %v1204, %v1205
  %v1208 = vlaneseq
  %v1209 = vshrl.u32 %v1208, 7
  %v1210 = vsub.s32 0, %v1209
  %v1211 = vrot.slane %v1203, %v1210
  %v1213 = vmul.f32 %v1146, %v1211
  %v1214 = vmul.f32 %v1147, %v1211
  %v1215 = vmul.f32 %v1148, %v1211
  %v1216 = vmul.f32 %v1149, %v1211
  %v1218 = vlaneseq
  %v1219 = vshrl.u32 %v1218, 7
  %v1220 = vsub.s32 0, %v1219
  %v1221 = vrot.slane %v1206, %v1220
  %v1223 = vadd.f32 %v1213, %v1221
  %v1224 = vadd.f32 %v1214, %v1221
  %v1225 = vadd.f32 %v1215, %v1221
  %v1226 = vadd.f32 %v1216, %v1221
  %1227 = vst [vmem:[%s13] sm:$0xff] %v1223
  %1228 = vst [vmem:[%s13 + $0x8] sm:$0xff] %v1224
  %1229 = vst [vmem:[%s13 + $0x10] sm:$0xff] %v1225
  %1230 = vst [vmem:[%s13 + $0x18] sm:$0xff] %v1226
  // Predicated region
  $region54: #{_convblock_forward.1} parent=0 // pred_check
    _
  $region55: #{_convblock_forward.1} parent=0 // pred_check_branch
    %1232 = sbr.rel (0) target = $region57
  $region56: #{_convblock_forward.1} parent=0 // pred_region
    _
  $region57: #{_convblock_forward.1} parent=0 // pred_fallthru
    _
  // Predicated region
  $region58: #{_convblock_forward.1} parent=0 // pred_check
    _
  $region59: #{_convblock_forward.1} parent=0 // pred_check_branch
    %1234 = sbr.rel (0) target = $region61
  $region60: #{_convblock_forward.1} parent=0 // pred_region
    _
  $region61: #{_convblock_forward.1} parent=0 // pred_fallthru
    _

</llo_original>
